<compile_context>
chip_gen: v6e
topology: v6e:2x2x1
jax: 0.10.0
libtpu: 0.0.40
codegen_flags: <defaults>
</compile_context>

<pallas_src>
import jax
import jax.numpy as jnp
from jax.experimental import pallas as pl
from jax.experimental.pallas import tpu as pltpu


def _round_up(v, m):
    return ((v + m - 1) // m) * m


def _make_kernel(expand_theta, layer_norm, M, E, precision):
    def kernel(*refs):
        if layer_norm:
            (y_ref, x_ref, rf_ref, wg_ref, wrf_ref, b_ref,
             gam_ref, bet_ref, o_ref) = refs
        else:
            y_ref, x_ref, rf_ref, wg_ref, wrf_ref, b_ref, o_ref = refs

        yt = y_ref[0]                       # [3, M]  components lane-major
        xq = x_ref[0]                       # [TN, 3]
        rf = rf_ref[0]                      # [TN, M, F]
        tn = rf.shape[0]

        # relative positions / heading, all [TN, M] with M on the lane axis
        px = yt[0:1, :] - xq[:, 0:1]
        py = yt[1:2, :] - xq[:, 1:2]
        rt = yt[2:3, :] - xq[:, 2:3]

        # rotate rel_pos into each query frame: [px, py] @ [[c, -s], [s, c]]
        ct = jnp.cos(xq[:, 2:3])            # [TN, 1]
        st = jnp.sin(xq[:, 2:3])
        tx = px * ct + py * st              # [TN, M]
        ty = py * ct - px * st              # [TN, M]

        wg = wg_ref[...]                    # [n_geo, E]

        def wrow(r):                        # one weight row, broadcastable
            return wg[r:r + 1][None]        # [1, 1, E]

        # geo part of the Linear as rank-1 broadcast FMAs (VPU), no concat
        g = tx[:, :, None] * wrow(0) + ty[:, :, None] * wrow(1)
        if expand_theta:
            g = (g + jnp.cos(rt)[:, :, None] * wrow(2)
                 + jnp.sin(rt)[:, :, None] * wrow(3))
        else:
            g = g + rt[:, :, None] * wrow(2)

        # relative-feature part on the MXU
        h_rf = jnp.dot(rf.reshape(tn * M, -1), wrf_ref[...],
                       preferred_element_type=jnp.float32,
                       precision=precision).reshape(tn, M, E)

        h = jnp.maximum(g + h_rf + b_ref[...][None], 0.0)     # bias + ReLU

        if layer_norm:
            # single-pass mean / variance over the E lanes
            inv_e = 1.0 / E
            mu = jnp.sum(h, axis=-1, keepdims=True) * inv_e
            var = jnp.maximum(
                jnp.sum(h * h, axis=-1, keepdims=True) * inv_e - mu * mu, 0.0)
            h = (h - mu) * jax.lax.rsqrt(var + 1e-5)
            h = h * gam_ref[...][None] + bet_ref[...][None]

        # lane-dense store: [TN, M*E]
        o_ref[0] = h.reshape(tn, M * E).astype(o_ref.dtype)

    return kernel


def _pick_tile_n(N, M, F, E):
    """Tile size along N (multiple of 8 or == N) plus padded N; sized so the
    double-buffered streamed blocks stay a few MiB (fits v7x's 64 MiB VMEM)."""
    # f32 VMEM bytes per N-row after (8,128) tile padding of trailing dims:
    #   rf in : round_up(M,8) * round_up(F,128)
    #   out   : round_up(M*E,128)   (lane-dense)
    #   x in  : 3 -> 128 lanes
    row_bytes = 4 * (_round_up(M, 8) * _round_up(F, 128)
                     + _round_up(M * E, 128)
                     + 128)
    budget = 4 << 20                        # per-buffer target (x2 double-buffer)
    tn = min(256, max(8, budget // row_bytes))
    tn -= tn % 8
    if tn >= N:
        return N, N, row_bytes
    return tn, _round_up(N, tn), row_bytes


def relative_feature_embedder(y, x, relative_features, weight, bias,
                              gamma=None, beta=None, *,
                              expand_theta=True, layer_norm=False,
                              out_dtype=None, mxu_precision=None):
    """Pallas TPU forward of RelativeFeatureEmbedder (equal-rank y/x branch)."""
    B, M, _ = y.shape
    _, N, _ = x.shape
    F = relative_features.shape[-1]
    d_in, E = weight.shape
    n_geo = 4 if expand_theta else 3
    assert d_in == n_geo + F, (d_in, n_geo, F)
    assert F >= 1  # TODO(synk): F == 0 (no relative features) is not wired up.
    if out_dtype is None:
        out_dtype = x.dtype

    # Pre-transpose y so (x, y, theta) components are lane-major in-kernel.
    y_t = jnp.transpose(y, (0, 2, 1))                      # [B, 3, M]
    # Split the Linear: geo rows feed the VPU FMAs, feature rows feed the MXU.
    w_geo = weight[:n_geo]                                 # [n_geo, E]
    w_rf = weight[n_geo:]                                  # [F, E]
    b2 = bias.reshape(1, E)

    TN, N_pad, row_bytes = _pick_tile_n(N, M, F, E)
    if N_pad != N:                                         # padded rows sliced off below
        pad = N_pad - N
        x = jnp.pad(x, ((0, 0), (0, pad), (0, 0)))
        relative_features = jnp.pad(relative_features,
                                    ((0, 0), (0, pad), (0, 0), (0, 0)))

    args = [y_t, x, relative_features, w_geo, w_rf, b2]
    in_specs = [
        pl.BlockSpec((1, 3, M), lambda i, j: (i, 0, 0)),
        pl.BlockSpec((1, TN, 3), lambda i, j: (i, j, 0)),
        pl.BlockSpec((1, TN, M, F), lambda i, j: (i, j, 0, 0)),
        pl.BlockSpec((n_geo, E), lambda i, j: (0, 0)),     # weights stay resident
        pl.BlockSpec((F, E), lambda i, j: (0, 0)),
        pl.BlockSpec((1, E), lambda i, j: (0, 0)),
    ]
    if layer_norm:
        args += [gamma.reshape(1, E), beta.reshape(1, E)]
        in_specs += [pl.BlockSpec((1, E), lambda i, j: (0, 0))] * 2

    # Explicit VMEM budget sized from the tiles, kept well under v7x's 64 MiB.
    vmem_limit = int(min(48 << 20, max(16 << 20, 4 * TN * row_bytes + (2 << 20))))

    # TODO(synk): return_features=True (second output `inp`) and the
    # len(y.shape) == len(x.shape) + 1 branch (y pre-paired per query) are not
    # wired up; only the default equal-rank forward path is implemented.
    out = pl.pallas_call(
        _make_kernel(expand_theta, layer_norm, M, E, mxu_precision),
        out_shape=jax.ShapeDtypeStruct((B, N_pad, M * E), out_dtype),
        grid=(B, N_pad // TN),
        in_specs=in_specs,
        out_specs=pl.BlockSpec((1, TN, M * E), lambda i, j: (i, j, 0)),
        compiler_params=pltpu.CompilerParams(
            dimension_semantics=("parallel", "parallel"),
            vmem_limit_bytes=vmem_limit),
    )(*args)

    return out[:, :N].reshape(B, N, M, E)


def reference(y, x, rf, weight, bias, gamma=None, beta=None, *,
              expand_theta=True, layer_norm=False):
    """Pure-JAX transcription of the PyTorch forward (equal-rank branch)."""
    rel_pos = y[..., None, :, :2] - x[..., :, None, :2]         # [B, N, M, 2]
    rel_theta = y[..., None, :, 2:3] - x[..., :, None, 2:3]     # [B, N, M, 1]
    theta = x[..., 2]                                           # [B, N]
    rot = jnp.stack(
        [jnp.stack([jnp.cos(theta), -jnp.sin(theta)], axis=-1),
         jnp.stack([jnp.sin(theta), jnp.cos(theta)], axis=-1)],
        axis=-2)[..., None, :, :]                               # [B, N, 1, 2, 2]
    transformed = jnp.matmul(rel_pos[..., None, :], rot,
                             precision=jax.lax.Precision.HIGHEST)[..., 0, :]
    if expand_theta:
        inp = jnp.concatenate(
            [transformed, jnp.cos(rel_theta), jnp.sin(rel_theta), rf], axis=-1)
    else:
        inp = jnp.concatenate([transformed, rel_theta, rf], axis=-1)
    h = jnp.dot(inp, weight, precision=jax.lax.Precision.HIGHEST) + bias
    h = jnp.maximum(h, 0.0)
    if layer_norm:
        mu = jnp.mean(h, axis=-1, keepdims=True)
        var = jnp.mean((h - mu) ** 2, axis=-1, keepdims=True)
        h = (h - mu) / jnp.sqrt(var + 1e-5) * gamma + beta
    return h


if __name__ == "__main__":
    B, N, M = 2, 8, 8
    inp_dim, emb_dim = 7, 32          # expand_theta=True -> Linear(inp_dim+1, emb_dim)
    F = inp_dim - 3                   # 2 (rot pos) + cos + sin + F = inp_dim + 1
    d_in = inp_dim + 1

    key = jax.random.PRNGKey(0)
    k1, k2, k3, k4, k5, k6, k7 = jax.random.split(key, 7)
    y = jax.random.normal(k1, (B, M, 3), jnp.float32)
    x = jax.random.normal(k2, (B, N, 3), jnp.float32)
    rel_feat = jax.random.normal(k3, (B, N, M, F), jnp.float32)

    # deterministic nn.Linear-style init (uniform +-1/sqrt(fan_in))
    bound = 1.0 / (d_in ** 0.5)
    weight = jax.random.uniform(k4, (d_in, emb_dim), jnp.float32, -bound, bound)
    bias = jax.random.uniform(k5, (emb_dim,), jnp.float32, -bound, bound)
    gamma = 1.0 + 0.1 * jax.random.normal(k6, (emb_dim,), jnp.float32)
    beta = 0.1 * jax.random.normal(k7, (emb_dim,), jnp.float32)

    ref = reference(y, x, rel_feat, weight, bias)

    # 1) bit-accurate path (HIGHEST MXU precision) vs f32 reference
    out_hi = jax.block_until_ready(relative_feature_embedder(
        y, x, rel_feat, weight, bias, mxu_precision=jax.lax.Precision.HIGHEST))
    assert out_hi.shape == (B, N, M, emb_dim), out_hi.shape
    assert jnp.allclose(out_hi, ref, atol=1e-4, rtol=1e-4), \
        float(jnp.max(jnp.abs(out_hi - ref)))

    # 2) default fast path (single-pass MXU for the rf term; geo part exact f32)
    out_fast = jax.block_until_ready(
        relative_feature_embedder(y, x, rel_feat, weight, bias))
    assert out_fast.shape == (B, N, M, emb_dim), out_fast.shape
    assert jnp.allclose(out_fast, ref, atol=5e-2, rtol=5e-2), \
        float(jnp.max(jnp.abs(out_fast - ref)))

    # 3) layer_norm branch
    out_ln = jax.block_until_ready(relative_feature_embedder(
        y, x, rel_feat, weight, bias, gamma, beta, layer_norm=True,
        mxu_precision=jax.lax.Precision.HIGHEST))
    ref_ln = reference(y, x, rel_feat, weight, bias, gamma, beta, layer_norm=True)
    assert jnp.allclose(out_ln, ref_ln, atol=1e-4, rtol=1e-4), \
        float(jnp.max(jnp.abs(out_ln - ref_ln)))

    print("KERNEL_OK")
</pallas_src>

<mosaic_0001>
module attributes {stable_mosaic.version = 11 : i64} {
  func.func @kernel(%arg0: i32, %arg1: i32, %arg2: memref<1x3x8xf32, #tpu.memory_space<vmem>>, %arg3: memref<1x8x3xf32, #tpu.memory_space<vmem>>, %arg4: memref<1x8x8x4xf32, #tpu.memory_space<vmem>>, %arg5: memref<4x32xf32, #tpu.memory_space<vmem>>, %arg6: memref<4x32xf32, #tpu.memory_space<vmem>>, %arg7: memref<1x32xf32, #tpu.memory_space<vmem>>, %arg8: memref<1x8x256xf32, #tpu.memory_space<vmem>>) attributes {dimension_semantics = [#tpu.dimension_semantics<parallel>, #tpu.dimension_semantics<parallel>], iteration_bounds = array<i64: 2, 1>, scalar_prefetch = 0 : i64, scratch_operands = 0 : i64, tpu.core_type = #tpu.core_type<tc>, window_params = [{transform_indices = @transform_0, window_bounds = array<i64: 1, 3, 8>}, {transform_indices = @transform_1, window_bounds = array<i64: 1, 8, 3>}, {transform_indices = @transform_2, window_bounds = array<i64: 1, 8, 8, 4>}, {pipeline_mode = #tpu.pipeline_mode<synchronous>, transform_indices = @transform_3, window_bounds = array<i64: 4, 32>}, {pipeline_mode = #tpu.pipeline_mode<synchronous>, transform_indices = @transform_4, window_bounds = array<i64: 4, 32>}, {pipeline_mode = #tpu.pipeline_mode<synchronous>, transform_indices = @transform_5, window_bounds = array<i64: 1, 32>}, {transform_indices = @transform_6, window_bounds = array<i64: 1, 8, 256>}]} {
    %c0 = arith.constant 0 : index
    %c0_0 = arith.constant 0 : index
    %c0_1 = arith.constant 0 : index
    %0 = vector.load %arg2[%c0, %c0_0, %c0_1] : memref<1x3x8xf32, #tpu.memory_space<vmem>>, vector<1x3x8xf32>
    %1 = vector.shape_cast %0 : vector<1x3x8xf32> to vector<3x8xf32>
    %c0_2 = arith.constant 0 : index
    %c0_3 = arith.constant 0 : index
    %c0_4 = arith.constant 0 : index
    %2 = vector.load %arg3[%c0_2, %c0_3, %c0_4] : memref<1x8x3xf32, #tpu.memory_space<vmem>>, vector<1x8x3xf32>
    %3 = vector.shape_cast %2 : vector<1x8x3xf32> to vector<8x3xf32>
    %c0_5 = arith.constant 0 : index
    %c0_6 = arith.constant 0 : index
    %c0_7 = arith.constant 0 : index
    %c0_8 = arith.constant 0 : index
    %4 = vector.load %arg4[%c0_5, %c0_6, %c0_7, %c0_8] : memref<1x8x8x4xf32, #tpu.memory_space<vmem>>, vector<1x8x8x4xf32>
    %5 = vector.shape_cast %4 : vector<1x8x8x4xf32> to vector<8x8x4xf32>
    %6 = vector.extract_strided_slice %1 {offsets = [0, 0], sizes = [1, 8], strides = [1, 1]} : vector<3x8xf32> to vector<1x8xf32>
    %7 = vector.extract_strided_slice %3 {offsets = [0, 0], sizes = [8, 1], strides = [1, 1]} : vector<8x3xf32> to vector<8x1xf32>
    %8 = vector.broadcast %6 : vector<1x8xf32> to vector<8x8xf32>
    %9 = vector.broadcast %7 : vector<8x1xf32> to vector<8x8xf32>
    %10 = arith.subf %8, %9 : vector<8x8xf32>
    %11 = vector.extract_strided_slice %1 {offsets = [1, 0], sizes = [1, 8], strides = [1, 1]} : vector<3x8xf32> to vector<1x8xf32>
    %12 = vector.extract_strided_slice %3 {offsets = [0, 1], sizes = [8, 1], strides = [1, 1]} : vector<8x3xf32> to vector<8x1xf32>
    %13 = vector.broadcast %11 : vector<1x8xf32> to vector<8x8xf32>
    %14 = vector.broadcast %12 : vector<8x1xf32> to vector<8x8xf32>
    %15 = arith.subf %13, %14 : vector<8x8xf32>
    %16 = vector.extract_strided_slice %1 {offsets = [2, 0], sizes = [1, 8], strides = [1, 1]} : vector<3x8xf32> to vector<1x8xf32>
    %17 = vector.extract_strided_slice %3 {offsets = [0, 2], sizes = [8, 1], strides = [1, 1]} : vector<8x3xf32> to vector<8x1xf32>
    %18 = vector.broadcast %16 : vector<1x8xf32> to vector<8x8xf32>
    %19 = vector.broadcast %17 : vector<8x1xf32> to vector<8x8xf32>
    %20 = arith.subf %18, %19 : vector<8x8xf32>
    %21 = vector.extract_strided_slice %3 {offsets = [0, 2], sizes = [8, 1], strides = [1, 1]} : vector<8x3xf32> to vector<8x1xf32>
    %22 = math.cos %21 : vector<8x1xf32>
    %23 = vector.extract_strided_slice %3 {offsets = [0, 2], sizes = [8, 1], strides = [1, 1]} : vector<8x3xf32> to vector<8x1xf32>
    %24 = math.sin %23 : vector<8x1xf32>
    %25 = vector.broadcast %22 : vector<8x1xf32> to vector<8x8xf32>
    %26 = arith.mulf %10, %25 : vector<8x8xf32>
    %27 = vector.broadcast %24 : vector<8x1xf32> to vector<8x8xf32>
    %28 = arith.mulf %15, %27 : vector<8x8xf32>
    %29 = arith.addf %26, %28 : vector<8x8xf32>
    %30 = vector.broadcast %22 : vector<8x1xf32> to vector<8x8xf32>
    %31 = arith.mulf %15, %30 : vector<8x8xf32>
    %32 = vector.broadcast %24 : vector<8x1xf32> to vector<8x8xf32>
    %33 = arith.mulf %10, %32 : vector<8x8xf32>
    %34 = arith.subf %31, %33 : vector<8x8xf32>
    %c0_9 = arith.constant 0 : index
    %c0_10 = arith.constant 0 : index
    %35 = vector.load %arg5[%c0_9, %c0_10] : memref<4x32xf32, #tpu.memory_space<vmem>>, vector<4x32xf32>
    %36 = vector.shape_cast %29 : vector<8x8xf32> to vector<8x8x1xf32>
    %37 = vector.extract_strided_slice %35 {offsets = [0, 0], sizes = [1, 32], strides = [1, 1]} : vector<4x32xf32> to vector<1x32xf32>
    %38 = vector.shape_cast %37 : vector<1x32xf32> to vector<1x1x32xf32>
    %39 = vector.broadcast %36 : vector<8x8x1xf32> to vector<8x8x32xf32>
    %40 = vector.broadcast %38 : vector<1x1x32xf32> to vector<8x8x32xf32>
    %41 = arith.mulf %39, %40 : vector<8x8x32xf32>
    %42 = vector.shape_cast %34 : vector<8x8xf32> to vector<8x8x1xf32>
    %43 = vector.extract_strided_slice %35 {offsets = [1, 0], sizes = [1, 32], strides = [1, 1]} : vector<4x32xf32> to vector<1x32xf32>
    %44 = vector.shape_cast %43 : vector<1x32xf32> to vector<1x1x32xf32>
    %45 = vector.broadcast %42 : vector<8x8x1xf32> to vector<8x8x32xf32>
    %46 = vector.broadcast %44 : vector<1x1x32xf32> to vector<8x8x32xf32>
    %47 = arith.mulf %45, %46 : vector<8x8x32xf32>
    %48 = arith.addf %41, %47 : vector<8x8x32xf32>
    %49 = math.cos %20 : vector<8x8xf32>
    %50 = vector.shape_cast %49 : vector<8x8xf32> to vector<8x8x1xf32>
    %51 = vector.extract_strided_slice %35 {offsets = [2, 0], sizes = [1, 32], strides = [1, 1]} : vector<4x32xf32> to vector<1x32xf32>
    %52 = vector.shape_cast %51 : vector<1x32xf32> to vector<1x1x32xf32>
    %53 = vector.broadcast %50 : vector<8x8x1xf32> to vector<8x8x32xf32>
    %54 = vector.broadcast %52 : vector<1x1x32xf32> to vector<8x8x32xf32>
    %55 = arith.mulf %53, %54 : vector<8x8x32xf32>
    %56 = arith.addf %48, %55 : vector<8x8x32xf32>
    %57 = math.sin %20 : vector<8x8xf32>
    %58 = vector.shape_cast %57 : vector<8x8xf32> to vector<8x8x1xf32>
    %59 = vector.extract_strided_slice %35 {offsets = [3, 0], sizes = [1, 32], strides = [1, 1]} : vector<4x32xf32> to vector<1x32xf32>
    %60 = vector.shape_cast %59 : vector<1x32xf32> to vector<1x1x32xf32>
    %61 = vector.broadcast %58 : vector<8x8x1xf32> to vector<8x8x32xf32>
    %62 = vector.broadcast %60 : vector<1x1x32xf32> to vector<8x8x32xf32>
    %63 = arith.mulf %61, %62 : vector<8x8x32xf32>
    %64 = arith.addf %56, %63 : vector<8x8x32xf32>
    %65 = vector.shape_cast %5 : vector<8x8x4xf32> to vector<64x4xf32>
    %c0_11 = arith.constant 0 : index
    %c0_12 = arith.constant 0 : index
    %66 = vector.load %arg6[%c0_11, %c0_12] : memref<4x32xf32, #tpu.memory_space<vmem>>, vector<4x32xf32>
    %cst = arith.constant dense<0.000000e+00> : vector<64x32xf32>
    %67 = tpu.matmul %65, %66, %cst {dimension_numbers = #tpu.dot_dimension_numbers<[1], [0], [0], [1], [0, 0, 1, 1], [], []>, precision = #tpu.contract_precision<fp32>} : vector<64x4xf32>, vector<4x32xf32>, vector<64x32xf32> -> vector<64x32xf32>
    %68 = vector.shape_cast %67 : vector<64x32xf32> to vector<8x8x32xf32>
    %69 = arith.addf %64, %68 : vector<8x8x32xf32>
    %c0_13 = arith.constant 0 : index
    %c0_14 = arith.constant 0 : index
    %70 = vector.load %arg7[%c0_13, %c0_14] : memref<1x32xf32, #tpu.memory_space<vmem>>, vector<1x32xf32>
    %71 = vector.shape_cast %70 : vector<1x32xf32> to vector<1x1x32xf32>
    %72 = vector.broadcast %71 : vector<1x1x32xf32> to vector<8x8x32xf32>
    %73 = arith.addf %69, %72 : vector<8x8x32xf32>
    %cst_15 = arith.constant 0.000000e+00 : f32
    %74 = vector.broadcast %cst_15 : f32 to vector<8x8x32xf32>
    %75 = arith.maximumf %73, %74 : vector<8x8x32xf32>
    %76 = vector.shape_cast %75 : vector<8x8x32xf32> to vector<8x256xf32>
    %c0_16 = arith.constant 0 : index
    %c0_17 = arith.constant 0 : index
    %c0_18 = arith.constant 0 : index
    %77 = vector.load %arg8[%c0_16, %c0_17, %c0_18] : memref<1x8x256xf32, #tpu.memory_space<vmem>>, vector<1x8x256xf32>
    %78 = vector.shape_cast %77 : vector<1x8x256xf32> to vector<8x256xf32>
    %79 = vector.shape_cast %76 : vector<8x256xf32> to vector<1x8x256xf32>
    tpu.vector_store %arg8[%c0_16, %c0_17, %c0_18], %79 {strides = array<i32>} : memref<1x8x256xf32, #tpu.memory_space<vmem>>, vector<1x8x256xf32>,
    return
  }
  func.func @transform_0(%arg0: i32, %arg1: i32) -> (i32, i32, i32) {
    %c0_i32 = arith.constant 0 : i32
    %c0_i32_0 = arith.constant 0 : i32
    %c0_i32_1 = arith.constant 0 : i32
    return %arg0, %c0_i32, %c0_i32_0 : i32, i32, i32
  }
  func.func @transform_1(%arg0: i32, %arg1: i32) -> (i32, i32, i32) {
    %c0_i32 = arith.constant 0 : i32
    %c0_i32_0 = arith.constant 0 : i32
    return %arg0, %arg1, %c0_i32 : i32, i32, i32
  }
  func.func @transform_2(%arg0: i32, %arg1: i32) -> (i32, i32, i32, i32) {
    %c0_i32 = arith.constant 0 : i32
    %c0_i32_0 = arith.constant 0 : i32
    %c0_i32_1 = arith.constant 0 : i32
    return %arg0, %arg1, %c0_i32, %c0_i32_0 : i32, i32, i32, i32
  }
  func.func @transform_3(%arg0: i32, %arg1: i32) -> (i32, i32) {
    %c0_i32 = arith.constant 0 : i32
    %c0_i32_0 = arith.constant 0 : i32
    %c0_i32_1 = arith.constant 0 : i32
    return %c0_i32, %c0_i32_0 : i32, i32
  }
  func.func @transform_4(%arg0: i32, %arg1: i32) -> (i32, i32) {
    %c0_i32 = arith.constant 0 : i32
    %c0_i32_0 = arith.constant 0 : i32
    %c0_i32_1 = arith.constant 0 : i32
    return %c0_i32, %c0_i32_0 : i32, i32
  }
  func.func @transform_5(%arg0: i32, %arg1: i32) -> (i32, i32) {
    %c0_i32 = arith.constant 0 : i32
    %c0_i32_0 = arith.constant 0 : i32
    %c0_i32_1 = arith.constant 0 : i32
    return %c0_i32, %c0_i32_0 : i32, i32
  }
  func.func @transform_6(%arg0: i32, %arg1: i32) -> (i32, i32, i32) {
    %c0_i32 = arith.constant 0 : i32
    %c0_i32_0 = arith.constant 0 : i32
    return %arg0, %arg1, %c0_i32 : i32, i32, i32
  }
}

</mosaic_0001>

<llo_original>
// kernel: tpu_custom_call.1
$region0: #{tpu_custom_call.1}
  #allocation0 [shape = 'u32[]', space=smem, size = 0x4, offset = 0x4, fixed_abs, tag = 'smem constant byte address 0x4 - core index']
  #allocation1 [shape = 'u32[144,128]{1,0:T(1,128)}', space=vmem, size = 0x12000, scoped, tag = 'internal scratch']
  %s0 = inlined_call_operand.vmem [shape: f32[2,3,8], index: 0, kind: input, shape index: {}]
  %s1 = inlined_call_operand.vmem [shape: f32[2,8,3], index: 1, kind: input, shape index: {}]
  %s2 = inlined_call_operand.vmem [shape: f32[2,8,8,4], index: 2, kind: input, shape index: {}]
  %s3 = inlined_call_operand.vmem [shape: f32[4,32], index: 3, kind: input, shape index: {}]
  %s4 = inlined_call_operand.vmem [shape: f32[4,32], index: 4, kind: input, shape index: {}]
  %s5 = inlined_call_operand.vmem [shape: f32[1,32], index: 5, kind: input, shape index: {}]
  %s6 = inlined_call_operand.hbm [shape: f32[2,8,256], index: 6, kind: output, shape index: {}]
  %s7 = sld [smem:[#allocation0]]
  $region57: #{tpu_custom_call.1} parent=0
    _
  %s9 = ssub.s32 1, %s7
  %s10 = scalar_select 0, %s9, %s7
  $region1: #{tpu_custom_call.1} parent=0
    #allocation2 [shape = 'u8[16384]{0}', space=vmem, size = 0x4000, scoped, tag = 'output window, operand 0']
    #allocation3 [shape = 's32[2]{0}', space=sflag, size = 0x8, scoped, tag = 'scoped memory for tpu_custom_call.1']
    %11 = vsyncpa [#allocation3], 0
    %s12 = scalar_lea.sflag [#allocation3], 1
    %13 = vsyncpa %s12, 0
    loop: start=0, step=1, limit=4
    $region2: #{tpu_custom_call.1} parent=1 // loop_pre_header
      _
    $region3: #{tpu_custom_call.1} parent=1 // loop_header
      %s15 = sphi 0, %s19
      %p16 = scmp.ge.s32.totalorder %s15, 4
      %s22 = sphi 0, %s34
      %s23 = sphi 0, %s30
      %s24 = sphi 0, %s22
      %s25 = sphi 0, %s23
      %s26 = sphi 0, %s24
      %s27 = sphi 0, %s25
      %s37 = sphi 0, %s39
      %s40 = sphi 0, %s37
      %s41 = sphi 0, %s40
      %s57 = sphi 0, %s41
      %s65 = sphi 0, %s67
      %s68 = sphi 0, %s65
      %s69 = sphi 0, %s68
      %s85 = sphi 0, %s69
      %s93 = sphi 0, %s95
      %s96 = sphi 0, %s93
      %s97 = sphi 0, %s96
      %s113 = sphi 0, %s97
      %s117 = sphi 0, %s117
      %s119 = sphi 0, %s117
      %s120 = sphi 0, %s119
      %s134 = sphi 0, %s120
      %s138 = sphi 0, %s138
      %s140 = sphi 0, %s138
      %s141 = sphi 0, %s140
      %s155 = sphi 0, %s141
      %s159 = sphi 0, %s159
      %s161 = sphi 0, %s159
      %s162 = sphi 0, %s161
      %s176 = sphi 0, %s162
      %s184 = sphi 0, %s186
      %s187 = sphi 0, %s184
      %s188 = sphi 0, %s187
      %s204 = sphi 0, %s188
    $region4: #{tpu_custom_call.1} parent=1 // loop_header_branch
      %18 = sbr.rel (%p16) target = $region8
    $region5: #{tpu_custom_call.1} parent=1 // loop_body
      %s20 = ssub.s32 %s15, 1
      %s21 = ssub.s32 %s15, 2
      %s28 = sadd.s32 1, %s23
      %p29 = scmp.ge.s32.totalorder %s28, 1
      %s30 = scalar_select %p29, 0, %s28
      %s31 = sadd.s32 1, %s22
      %s32 = scalar_select %p29, %s31, %s22
      %p33 = scmp.ge.s32.totalorder %s32, 2
      %s34 = scalar_select %p33, 0, %s32
      %s35 = ssub.s32 %s22, %s34
      %p36 = scmp.eq.s32.totalorder %s35, 0
      %s38 = sadd.s32 %s37, 1
      %s39 = scalar_select %p36, %s37, %s38
      %p42 = pneg %p36
      %p43 = scmp.eq.s32.totalorder %s15, 1
      %p44 = por %p42, %p43
      %p45 = scmp.ne.s32.totalorder %s37, %s40
      %p46 = scmp.eq.s32.totalorder %s15, 0
      %p47 = por %p45, %p46
      %p48 = scmp.ne.s32.totalorder %s37, %s40
      %p49 = scmp.eq.s32.totalorder %s20, 1
      %p50 = por %p48, %p49
      %p51 = scmp.ne.s32.totalorder %s40, %s41
      %p52 = scmp.eq.s32.totalorder %s20, 0
      %p53 = por %p51, %p52
      %p54 = scmp.ne.s32.totalorder %s40, %s41
      %p55 = scmp.eq.s32.totalorder %s21, 1
      %p56 = por %p54, %p55
      %p58 = scmp.ne.s32.totalorder %s41, %s57
      %p59 = scmp.eq.s32.totalorder %s21, 0
      %p60 = por %p58, %p59
      %s61 = ssub.s32 %s22, %s34
      %s62 = ssub.s32 %s23, %s30
      %s63 = sor.u32 %s61, %s62
      %p64 = scmp.eq.s32.totalorder %s63, 0
      %s66 = sadd.s32 %s65, 1
      %s67 = scalar_select %p64, %s65, %s66
      %p70 = pneg %p64
      %p71 = scmp.eq.s32.totalorder %s15, 1
      %p72 = por %p70, %p71
      %p73 = scmp.ne.s32.totalorder %s65, %s68
      %p74 = scmp.eq.s32.totalorder %s15, 0
      %p75 = por %p73, %p74
      %p76 = scmp.ne.s32.totalorder %s65, %s68
      %p77 = scmp.eq.s32.totalorder %s20, 1
      %p78 = por %p76, %p77
      %p79 = scmp.ne.s32.totalorder %s68, %s69
      %p80 = scmp.eq.s32.totalorder %s20, 0
      %p81 = por %p79, %p80
      %p82 = scmp.ne.s32.totalorder %s68, %s69
      %p83 = scmp.eq.s32.totalorder %s21, 1
      %p84 = por %p82, %p83
      %p86 = scmp.ne.s32.totalorder %s69, %s85
      %p87 = scmp.eq.s32.totalorder %s21, 0
      %p88 = por %p86, %p87
      %s89 = ssub.s32 %s22, %s34
      %s90 = ssub.s32 %s23, %s30
      %s91 = sor.u32 %s89, %s90
      %p92 = scmp.eq.s32.totalorder %s91, 0
      %s94 = sadd.s32 %s93, 1
      %s95 = scalar_select %p92, %s93, %s94
      %p98 = pneg %p92
      %p99 = scmp.eq.s32.totalorder %s15, 1
      %p100 = por %p98, %p99
      %p101 = scmp.ne.s32.totalorder %s93, %s96
      %p102 = scmp.eq.s32.totalorder %s15, 0
      %p103 = por %p101, %p102
      %p104 = scmp.ne.s32.totalorder %s93, %s96
      %p105 = scmp.eq.s32.totalorder %s20, 1
      %p106 = por %p104, %p105
      %p107 = scmp.ne.s32.totalorder %s96, %s97
      %p108 = scmp.eq.s32.totalorder %s20, 0
      %p109 = por %p107, %p108
      %p110 = scmp.ne.s32.totalorder %s96, %s97
      %p111 = scmp.eq.s32.totalorder %s21, 1
      %p112 = por %p110, %p111
      %p114 = scmp.ne.s32.totalorder %s97, %s113
      %p115 = scmp.eq.s32.totalorder %s21, 0
      %p116 = por %p114, %p115
      %s118 = sadd.s32 %s117, 1
      %p121 = scmp.eq.s32.totalorder %s15, 1
      %p122 = scmp.ne.s32.totalorder %s117, %s119
      %p123 = scmp.eq.s32.totalorder %s15, 0
      %p124 = por %p122, %p123
      %p125 = scmp.ne.s32.totalorder %s117, %s119
      %p126 = scmp.eq.s32.totalorder %s20, 1
      %p127 = por %p125, %p126
      %p128 = scmp.ne.s32.totalorder %s119, %s120
      %p129 = scmp.eq.s32.totalorder %s20, 0
      %p130 = por %p128, %p129
      %p131 = scmp.ne.s32.totalorder %s119, %s120
      %p132 = scmp.eq.s32.totalorder %s21, 1
      %p133 = por %p131, %p132
      %p135 = scmp.ne.s32.totalorder %s120, %s134
      %p136 = scmp.eq.s32.totalorder %s21, 0
      %p137 = por %p135, %p136
      %s139 = sadd.s32 %s138, 1
      %p142 = scmp.eq.s32.totalorder %s15, 1
      %p143 = scmp.ne.s32.totalorder %s138, %s140
      %p144 = scmp.eq.s32.totalorder %s15, 0
      %p145 = por %p143, %p144
      %p146 = scmp.ne.s32.totalorder %s138, %s140
      %p147 = scmp.eq.s32.totalorder %s20, 1
      %p148 = por %p146, %p147
      %p149 = scmp.ne.s32.totalorder %s140, %s141
      %p150 = scmp.eq.s32.totalorder %s20, 0
      %p151 = por %p149, %p150
      %p152 = scmp.ne.s32.totalorder %s140, %s141
      %p153 = scmp.eq.s32.totalorder %s21, 1
      %p154 = por %p152, %p153
      %p156 = scmp.ne.s32.totalorder %s141, %s155
      %p157 = scmp.eq.s32.totalorder %s21, 0
      %p158 = por %p156, %p157
      %s160 = sadd.s32 %s159, 1
      %p163 = scmp.eq.s32.totalorder %s15, 1
      %p164 = scmp.ne.s32.totalorder %s159, %s161
      %p165 = scmp.eq.s32.totalorder %s15, 0
      %p166 = por %p164, %p165
      %p167 = scmp.ne.s32.totalorder %s159, %s161
      %p168 = scmp.eq.s32.totalorder %s20, 1
      %p169 = por %p167, %p168
      %p170 = scmp.ne.s32.totalorder %s161, %s162
      %p171 = scmp.eq.s32.totalorder %s20, 0
      %p172 = por %p170, %p171
      %p173 = scmp.ne.s32.totalorder %s161, %s162
      %p174 = scmp.eq.s32.totalorder %s21, 1
      %p175 = por %p173, %p174
      %p177 = scmp.ne.s32.totalorder %s162, %s176
      %p178 = scmp.eq.s32.totalorder %s21, 0
      %p179 = por %p177, %p178
      %s180 = ssub.s32 %s22, %s34
      %s181 = ssub.s32 %s23, %s30
      %s182 = sor.u32 %s180, %s181
      %p183 = scmp.eq.s32.totalorder %s182, 0
      %s185 = sadd.s32 %s184, 1
      %s186 = scalar_select %p183, %s184, %s185
      %p189 = pneg %p183
      %p190 = scmp.eq.s32.totalorder %s15, 1
      %p191 = por %p189, %p190
      %p192 = scmp.ne.s32.totalorder %s184, %s187
      %p193 = scmp.eq.s32.totalorder %s15, 0
      %p194 = por %p192, %p193
      %p195 = scmp.ne.s32.totalorder %s184, %s187
      %p196 = scmp.eq.s32.totalorder %s20, 1
      %p197 = por %p195, %p196
      %p198 = scmp.ne.s32.totalorder %s187, %s188
      %p199 = scmp.eq.s32.totalorder %s20, 0
      %p200 = por %p198, %p199
      %p201 = scmp.ne.s32.totalorder %s187, %s188
      %p202 = scmp.eq.s32.totalorder %s21, 1
      %p203 = por %p201, %p202
      %p205 = scmp.ne.s32.totalorder %s188, %s204
      %p206 = scmp.eq.s32.totalorder %s21, 0
      %p207 = por %p205, %p206
      %p208 = scmp.le.s32.totalorder 1, %s15
      %p209 = scmp.lt.s32.totalorder %s15, 3
      %p210 = pnand %p208, %p209
      %p211 = pneg %p210
      // Predicated region
      $region9: #{tpu_custom_call.1} parent=5 // pred_check
        _
      $region10: #{tpu_custom_call.1} parent=5 // pred_check_branch
        %213 = sbr.rel (%p210) target = $region12
      $region11: #{tpu_custom_call.1} parent=5 // pred_region
        %s214 = ssub.s32 %s15, 1
        // Predicated region
        $region13: #{tpu_custom_call.1} parent=11 // pred_check
          %p215 = pneg %p130
        $region14: #{tpu_custom_call.1} parent=11 // pred_check_branch
          %217 = sbr.rel (%p215) target = $region16
        $region15: #{tpu_custom_call.1} parent=11 // pred_region
          _
        $region16: #{tpu_custom_call.1} parent=11 // pred_fallthru
          _
        // Predicated region
        $region17: #{tpu_custom_call.1} parent=11 // pred_check
          %p218 = pneg %p151
        $region18: #{tpu_custom_call.1} parent=11 // pred_check_branch
          %220 = sbr.rel (%p218) target = $region20
        $region19: #{tpu_custom_call.1} parent=11 // pred_region
          _
        $region20: #{tpu_custom_call.1} parent=11 // pred_fallthru
          _
        // Predicated region
        $region21: #{tpu_custom_call.1} parent=11 // pred_check
          %p221 = pneg %p172
        $region22: #{tpu_custom_call.1} parent=11 // pred_check_branch
          %223 = sbr.rel (%p221) target = $region24
        $region23: #{tpu_custom_call.1} parent=11 // pred_region
          _
        $region24: #{tpu_custom_call.1} parent=11 // pred_fallthru
          _
      $region12: #{tpu_custom_call.1} parent=5 // pred_fallthru
        _
      %p224 = scmp.lt.s32.totalorder %s15, 2
      // Predicated region
      $region25: #{tpu_custom_call.1} parent=5 // pred_check
        %p225 = pneg %p224
      $region26: #{tpu_custom_call.1} parent=5 // pred_check_branch
        %227 = sbr.rel (%p225) target = $region28
      $region27: #{tpu_custom_call.1} parent=5 // pred_region
        // Predicated region
        $region29: #{tpu_custom_call.1} parent=27 // pred_check
          %p228 = pneg %p47
        $region30: #{tpu_custom_call.1} parent=27 // pred_check_branch
          %230 = sbr.rel (%p228) target = $region32
        $region31: #{tpu_custom_call.1} parent=27 // pred_region
          %p231 = scmp.lt.s32.totalorder %s22, 1
          %s232 = scalar_select %p231, %s22, 1
          %s233 = smul.addr %s232, 4
          %s234 = scalar_lea.vmem %s0, %s233
        $region32: #{tpu_custom_call.1} parent=27 // pred_fallthru
          _
        // Predicated region
        $region33: #{tpu_custom_call.1} parent=27 // pred_check
          %p235 = pneg %p75
        $region34: #{tpu_custom_call.1} parent=27 // pred_check_branch
          %237 = sbr.rel (%p235) target = $region36
        $region35: #{tpu_custom_call.1} parent=27 // pred_region
          %p238 = scmp.lt.s32.totalorder %s22, 1
          %s239 = scalar_select %p238, %s22, 1
          %p240 = scmp.lt.s32.totalorder %s23, 0
          %s241 = scalar_select %p240, %s23, 0
          %s242 = sadd.s32 %s241, %s239
          %s243 = smul.addr %s242, 8
          %s244 = scalar_lea.vmem %s1, %s243
        $region36: #{tpu_custom_call.1} parent=27 // pred_fallthru
          _
        // Predicated region
        $region37: #{tpu_custom_call.1} parent=27 // pred_check
          %p245 = pneg %p103
        $region38: #{tpu_custom_call.1} parent=27 // pred_check_branch
          %247 = sbr.rel (%p245) target = $region40
        $region39: #{tpu_custom_call.1} parent=27 // pred_region
          %s248 = smul.u32 8, %s23
          %p249 = scmp.lt.s32.totalorder %s22, 1
          %s250 = scalar_select %p249, %s22, 1
          %p251 = scmp.lt.s32.totalorder %s248, 7
          %s252 = scalar_select %p251, %s248, 7
          %s253 = smul.addr %s250, 8
          %s254 = sadd.s32 %s252, %s253
          %s255 = smul.addr %s254, 8
          %s256 = scalar_lea.vmem %s2, %s255
          %s257 = smul.u32 8, %s23
        $region40: #{tpu_custom_call.1} parent=27 // pred_fallthru
          _
      $region28: #{tpu_custom_call.1} parent=5 // pred_fallthru
        _
      %p258 = scmp.le.s32.totalorder 1, %s15
      %p259 = scmp.lt.s32.totalorder %s15, 3
      %p260 = pnand %p258, %p259
      %p261 = pneg %p260
      // Predicated region
      $region41: #{tpu_custom_call.1} parent=5 // pred_check
        _
      $region42: #{tpu_custom_call.1} parent=5 // pred_check_branch
        %263 = sbr.rel (%p260) target = $region44
      $region43: #{tpu_custom_call.1} parent=5 // pred_region
        %s264 = ssub.s32 %s15, 1
        %p265 = scmp.lt.s32.totalorder %s24, 1
        %s266 = scalar_select %p265, %s24, 1
        %s267 = smul.addr %s266, 4
        %s268 = scalar_lea.vmem %s0, %s267
        %p269 = pneg %p53
        %p270 = pneg %p50
        %p271 = scmp.lt.s32.totalorder %s24, 1
        %s272 = scalar_select %p271, %s24, 1
        %p273 = scmp.lt.s32.totalorder %s25, 0
        %s274 = scalar_select %p273, %s25, 0
        %s275 = sadd.s32 %s274, %s272
        %s276 = smul.addr %s275, 8
        %s277 = scalar_lea.vmem %s1, %s276
        %p278 = pneg %p81
        %p279 = pneg %p78
        %s280 = smul.u32 8, %s25
        %p281 = scmp.lt.s32.totalorder %s24, 1
        %s282 = scalar_select %p281, %s24, 1
        %p283 = scmp.lt.s32.totalorder %s280, 7
        %s284 = scalar_select %p283, %s280, 7
        %s285 = smul.addr %s282, 8
        %s286 = sadd.s32 %s284, %s285
        %s287 = smul.addr %s286, 8
        %s288 = scalar_lea.vmem %s2, %s287
        %p289 = pneg %p109
        %p290 = pneg %p106
        %p291 = pneg %p130
        %p292 = pneg %p127
        %p293 = pneg %p151
        %p294 = pneg %p148
        %p295 = pneg %p172
        %p296 = pneg %p169
        %p297 = pneg %p200
        %p298 = pneg %p197
        %s299 = sand.u32 %s187, 1
        %s300 = scalar_lea.sflag [#allocation3], %s299
        %s301 = sand.u32 %s187, 1
        %s302 = smul.addr %s301, 16
        %s303 = scalar_lea.vmem [#allocation2], %s302
        %p304 = scmp.lt.s32.totalorder %s24, 1
        %s305 = scalar_select %p304, %s24, 1
        %s306 = smul.addr %s305, 4
        %s307 = scalar_lea.vmem %s0, %s306
        %p308 = scmp.lt.s32.totalorder %s24, 1
        %s309 = scalar_select %p308, %s24, 1
        %p310 = scmp.lt.s32.totalorder %s25, 0
        %s311 = scalar_select %p310, %s25, 0
        %s312 = sadd.s32 %s311, %s309
        %s313 = smul.addr %s312, 8
        %s314 = scalar_lea.vmem %s1, %s313
        %s315 = smul.u32 8, %s25
        %p316 = scmp.lt.s32.totalorder %s24, 1
        %s317 = scalar_select %p316, %s24, 1
        %p318 = scmp.lt.s32.totalorder %s315, 7
        %s319 = scalar_select %p318, %s315, 7
        %s320 = smul.addr %s317, 8
        %s321 = sadd.s32 %s319, %s320
        %s322 = smul.addr %s321, 8
        %s323 = scalar_lea.vmem %s2, %s322
        %s324 = smul.u32 8, %s25
        %v325 = vld [vmem:[%s307] sm:$0x7]
        %v326 = vld [vmem:[%s314] sm:$0xff]
        %v327 = vld [vmem:[%s323] sm:$0xff]
        %v328 = vld [vmem:[%s323 + $0x8] sm:$0xff]
        %v329 = vld [vmem:[%s323 + $0x10] sm:$0xff]
        %v330 = vld [vmem:[%s323 + $0x18] sm:$0xff]
        %v331 = vld [vmem:[%s323 + $0x20] sm:$0xff]
        %v332 = vld [vmem:[%s323 + $0x28] sm:$0xff]
        %v333 = vld [vmem:[%s323 + $0x30] sm:$0xff]
        %v334 = vld [vmem:[%s323 + $0x38] sm:$0xff]
        %v335 = vlaneseq
        %v336 = vshrl.u32 %v335, 7
        %v337 = vsub.s32 0, %v336
        %v338 = vrot.slane %v325, %v337
        %340 = vset.pattern.permute.xlu0 0
        %341 = vperm.xlu0 %340, %v326
        %v342 = vpop.permute.xlu0 %341
        %v344 = vsub.f32 %v338, %v342
        %v345 = vlaneseq
        %v346 = vshrl.u32 %v345, 7
        %v347 = vsub.s32 1, %v346
        %v348 = vrot.slane %v325, %v347
        %349 = vset.pattern.permute.xlu0 1
        %350 = vperm.xlu0 %349, %v326
        %v351 = vpop.permute.xlu0 %350
        %v353 = vsub.f32 %v348, %v351
        %v354 = vlaneseq
        %v355 = vshrl.u32 %v354, 7
        %v356 = vsub.s32 2, %v355
        %v357 = vrot.slane %v325, %v356
        %358 = vset.pattern.permute.xlu0 2
        %359 = vperm.xlu0 %358, %v326
        %v360 = vpop.permute.xlu0 %359
        %v362 = vsub.f32 %v357, %v360
        %v363 = vand.u32 2147483647, %v326
        %vm364 = vcmp.le.f32.partialorder %v363, 0.7853982
        %vm365 = vcmp.lt.s32.totalorder %v326, 0
        %v366 = vand.u32 %v326, 2139095040
        %v367 = vshrl.u32 %v366, 23
        %v368 = vsub.s32 %v367, 127
        %v369 = vand.u32 2147483647, %v326
        %v370 = vand.u32 %v369, 8388607
        %v371 = vor.u32 %v370, 8388608
        %v372 = vsub.s32 0, %v371
        %v373 = vadd.s32 %v368, 1
        %vm374 = vcmp.gt.s32.totalorder %v373, 0
        %v375 = vsel %vm374, %v373, 0
        %v376 = vshrl.u32 %v375, 5
        %v377 = vand.u32 %v375, 31
        %v378 = vsub.s32 32, %v377
        %v379 = vshrl.u32 683565275, %v378
        %v380 = vshll.u32 683565275, %v377
        %v381 = vshrl.u32 2475754826, %v378
        %v382 = vor.u32 %v380, %v381
        %v383 = vshll.u32 2475754826, %v377
        %v384 = vshrl.u32 2131351028, %v378
        %v385 = vor.u32 %v383, %v384
        %v386 = vshll.u32 2131351028, %v377
        %v387 = vshrl.u32 2102212464, %v378
        %v388 = vor.u32 %v386, %v387
        %v389 = vshll.u32 2102212464, %v377
        %v390 = vshrl.u32 920167782, %v378
        %v391 = vor.u32 %v389, %v390
        %v392 = vshll.u32 920167782, %v377
        %v393 = vshrl.u32 1326507024, %v378
        %v394 = vor.u32 %v392, %v393
        %vm395 = vcmp.lt.s32.totalorder %v376, 1
        %vm396 = vcmp.lt.s32.totalorder %v376, 2
        %vm397 = vcmp.lt.s32.totalorder %v376, 3
        %vm398 = vcmp.lt.s32.totalorder %v376, 4
        %v399 = vsel %vm395, %v379, %v382
        %v400 = vsel %vm398, %v388, 2102212464
        %v401 = vsel %vm397, %v385, %v400
        %v402 = vsel %vm396, %v399, %v401
        %v403 = vsel %vm395, %v382, %v385
        %v404 = vsel %vm398, %v391, 920167782
        %v405 = vsel %vm397, %v388, %v404
        %v406 = vsel %vm396, %v403, %v405
        %v407 = vsel %vm395, %v385, %v388
        %v408 = vsel %vm398, %v394, 1326507024
        %v409 = vsel %vm397, %v391, %v408
        %v410 = vsel %vm396, %v407, %v409
        %v411 = vshll.u32 %v371, 8
        %v412 = vmul.u32.u64.compose %v411, %v410
        %v413 = vextract.low.u32 %v412
        %v414 = vextract.high.u32 %v412
        %v415 = vmul.u32.u64.compose %v411, %v406
        %v416 = vextract.low.u32 %v415
        %v417 = vextract.high.u32 %v415
        %v418 = vmul.u32 %v411, %v402
        %v419 = vadd.s32 %v414, %v416
        %vm420 = vc.u32 %v414, %v416
        %v421 = vadd.s32 %v417, 1
        %v422 = vsel %vm420, %v421, %v417
        %v423 = vadd.s32 %v418, %v422
        %v424 = vadd.s32 %v423, 536870912
        %v425 = vshrl.u32 %v424, 30
        %v426 = vshll.u32 %v425, 30
        %v427 = vsub.s32 %v423, %v426
        %vm428 = vcmp.lt.s32.totalorder %v427, 0
        %v429 = vsub.s32 0, %v427
        %v430 = vsel %vm428, %v429, %v427
        %v431 = vclz %v430
        %v432 = vsub.s32 %v431, 2
        %vm433 = vcmp.gt.s32.totalorder 0, %v432
        %v434 = vsel %vm433, 0, %v432
        %v435 = vsub.s32 32, %v434
        %v436 = vshll.u32 %v427, %v434
        %v437 = vshrl.u32 %v419, %v435
        %v438 = vor.u32 %v436, %v437
        %v439 = vsub.s32 4294967266, %v434
        %v440 = vadd.s32 %v439, 127
        %v441 = vshll.u32 %v440, 23
        %v442 = vor.u32 4788187, %v441
        %v443 = vand.u32 2147483647, %v442
        %v445 = vcvt.s32.f32 %v438
        %v446 = vmul.f32 %v445, %v443
        %v447 = vxor.u32 %v446, 2147483648
        %v448 = vsel %vm365, %v447, %v446
        %v449 = vsub.s32 4, %v425
        %v450 = vsel %vm365, %v449, %v425
        %v451 = vsel %vm364, %v326, %v448
        %v452 = vsel %vm364, 0, %v450
        %v453 = vcosq.f32.pop %v451
        %v454 = vsinq.f32.pop %v451
        %vm455 = vweird.f32 %v326
        %v456 = vand.u32 %v452, 3
        %vm457 = vcmp.lt.s32.totalorder %v456, 2
        %vm458 = vcmp.eq.s32.totalorder %v456, 0
        %v459 = vxor.u32 %v454, 2147483648
        %v460 = vsel %vm458, %v453, %v459
        %vm461 = vcmp.eq.s32.totalorder %v456, 2
        %v462 = vxor.u32 %v453, 2147483648
        %v463 = vsel %vm461, %v462, %v454
        %v464 = vsel %vm457, %v460, %v463
        %v465 = vsel %vm455, nan, %v464
        %v466 = vand.u32 2147483647, %v326
        %vm467 = vcmp.le.f32.partialorder %v466, 0.7853982
        %vm468 = vcmp.lt.s32.totalorder %v326, 0
        %v469 = vand.u32 %v326, 2139095040
        %v470 = vshrl.u32 %v469, 23
        %v471 = vsub.s32 %v470, 127
        %v472 = vand.u32 2147483647, %v326
        %v473 = vand.u32 %v472, 8388607
        %v474 = vor.u32 %v473, 8388608
        %v475 = vsub.s32 0, %v474
        %v476 = vadd.s32 %v471, 1
        %vm477 = vcmp.gt.s32.totalorder %v476, 0
        %v478 = vsel %vm477, %v476, 0
        %v479 = vshrl.u32 %v478, 5
        %v480 = vand.u32 %v478, 31
        %v481 = vsub.s32 32, %v480
        %v482 = vshrl.u32 683565275, %v481
        %v483 = vshll.u32 683565275, %v480
        %v484 = vshrl.u32 2475754826, %v481
        %v485 = vor.u32 %v483, %v484
        %v486 = vshll.u32 2475754826, %v480
        %v487 = vshrl.u32 2131351028, %v481
        %v488 = vor.u32 %v486, %v487
        %v489 = vshll.u32 2131351028, %v480
        %v490 = vshrl.u32 2102212464, %v481
        %v491 = vor.u32 %v489, %v490
        %v492 = vshll.u32 2102212464, %v480
        %v493 = vshrl.u32 920167782, %v481
        %v494 = vor.u32 %v492, %v493
        %v495 = vshll.u32 920167782, %v480
        %v496 = vshrl.u32 1326507024, %v481
        %v497 = vor.u32 %v495, %v496
        %vm498 = vcmp.lt.s32.totalorder %v479, 1
        %vm499 = vcmp.lt.s32.totalorder %v479, 2
        %vm500 = vcmp.lt.s32.totalorder %v479, 3
        %vm501 = vcmp.lt.s32.totalorder %v479, 4
        %v502 = vsel %vm498, %v482, %v485
        %v503 = vsel %vm501, %v491, 2102212464
        %v504 = vsel %vm500, %v488, %v503
        %v505 = vsel %vm499, %v502, %v504
        %v506 = vsel %vm498, %v485, %v488
        %v507 = vsel %vm501, %v494, 920167782
        %v508 = vsel %vm500, %v491, %v507
        %v509 = vsel %vm499, %v506, %v508
        %v510 = vsel %vm498, %v488, %v491
        %v511 = vsel %vm501, %v497, 1326507024
        %v512 = vsel %vm500, %v494, %v511
        %v513 = vsel %vm499, %v510, %v512
        %v514 = vshll.u32 %v474, 8
        %v515 = vmul.u32.u64.compose %v514, %v513
        %v516 = vextract.low.u32 %v515
        %v517 = vextract.high.u32 %v515
        %v518 = vmul.u32.u64.compose %v514, %v509
        %v519 = vextract.low.u32 %v518
        %v520 = vextract.high.u32 %v518
        %v521 = vmul.u32 %v514, %v505
        %v522 = vadd.s32 %v517, %v519
        %vm523 = vc.u32 %v517, %v519
        %v524 = vadd.s32 %v520, 1
        %v525 = vsel %vm523, %v524, %v520
        %v526 = vadd.s32 %v521, %v525
        %v527 = vadd.s32 %v526, 536870912
        %v528 = vshrl.u32 %v527, 30
        %v529 = vshll.u32 %v528, 30
        %v530 = vsub.s32 %v526, %v529
        %vm531 = vcmp.lt.s32.totalorder %v530, 0
        %v532 = vsub.s32 0, %v530
        %v533 = vsel %vm531, %v532, %v530
        %v534 = vclz %v533
        %v535 = vsub.s32 %v534, 2
        %vm536 = vcmp.gt.s32.totalorder 0, %v535
        %v537 = vsel %vm536, 0, %v535
        %v538 = vsub.s32 32, %v537
        %v539 = vshll.u32 %v530, %v537
        %v540 = vshrl.u32 %v522, %v538
        %v541 = vor.u32 %v539, %v540
        %v542 = vsub.s32 4294967266, %v537
        %v543 = vadd.s32 %v542, 127
        %v544 = vshll.u32 %v543, 23
        %v545 = vor.u32 4788187, %v544
        %v546 = vand.u32 2147483647, %v545
        %v548 = vcvt.s32.f32 %v541
        %v549 = vmul.f32 %v548, %v546
        %v550 = vxor.u32 %v549, 2147483648
        %v551 = vsel %vm468, %v550, %v549
        %v552 = vsub.s32 4, %v528
        %v553 = vsel %vm468, %v552, %v528
        %v554 = vsel %vm467, %v326, %v551
        %v555 = vsel %vm467, 0, %v553
        %v556 = vcosq.f32.pop %v554
        %v557 = vsinq.f32.pop %v554
        %vm558 = vweird.f32 %v326
        %v559 = vadd.s32 %v555, 3
        %v560 = vand.u32 %v559, 3
        %vm561 = vcmp.lt.s32.totalorder %v560, 2
        %vm562 = vcmp.eq.s32.totalorder %v560, 0
        %v563 = vxor.u32 %v557, 2147483648
        %v564 = vsel %vm562, %v556, %v563
        %vm565 = vcmp.eq.s32.totalorder %v560, 2
        %v566 = vxor.u32 %v556, 2147483648
        %v567 = vsel %vm565, %v566, %v557
        %v568 = vsel %vm561, %v564, %v567
        %v569 = vsel %vm558, nan, %v568
        %571 = vset.pattern.permute.xlu0 2
        %572 = vperm.xlu0 %571, %v465
        %v573 = vpop.permute.xlu0 %572
        %v575 = vmul.f32 %v344, %v573
        %577 = vset.pattern.permute.xlu0 2
        %578 = vperm.xlu0 %577, %v569
        %v579 = vpop.permute.xlu0 %578
        %v581 = vmul.f32 %v353, %v579
        %v582 = vadd.f32 %v575, %v581
        %v583 = vmul.f32 %v353, %v573
        %v584 = vmul.f32 %v344, %v579
        %v585 = vsub.f32 %v583, %v584
        %v586 = vld [vmem:[%s3] sm:$0xf]
        %v587 = vlaneseq
        %v588 = vshrl.u32 %v587, 7
        %v589 = vsub.s32 0, %v588
        %v590 = vrot.slane %v582, %v589
        %592 = vbcast.lane.b32.xlu0 %v590, 256
        %v593 = vpop.permute.xlu0 %592
        %v594 = vlaneseq
        %v595 = vshrl.u32 %v594, 7
        %v596 = vsub.s32 1, %v595
        %v597 = vrot.slane %v582, %v596
        %599 = vbcast.lane.b32.xlu0 %v597, 256
        %v600 = vpop.permute.xlu0 %599
        %v601 = vlaneseq
        %v602 = vshrl.u32 %v601, 7
        %v603 = vsub.s32 2, %v602
        %v604 = vrot.slane %v582, %v603
        %606 = vbcast.lane.b32.xlu0 %v604, 256
        %v607 = vpop.permute.xlu0 %606
        %v608 = vlaneseq
        %v609 = vshrl.u32 %v608, 7
        %v610 = vsub.s32 3, %v609
        %v611 = vrot.slane %v582, %v610
        %613 = vbcast.lane.b32.xlu0 %v611, 256
        %v614 = vpop.permute.xlu0 %613
        %v615 = vlaneseq
        %v616 = vshrl.u32 %v615, 7
        %v617 = vsub.s32 4, %v616
        %v618 = vrot.slane %v582, %v617
        %620 = vbcast.lane.b32.xlu0 %v618, 256
        %v621 = vpop.permute.xlu0 %620
        %v622 = vlaneseq
        %v623 = vshrl.u32 %v622, 7
        %v624 = vsub.s32 5, %v623
        %v625 = vrot.slane %v582, %v624
        %627 = vbcast.lane.b32.xlu0 %v625, 256
        %v628 = vpop.permute.xlu0 %627
        %v629 = vlaneseq
        %v630 = vshrl.u32 %v629, 7
        %v631 = vsub.s32 6, %v630
        %v632 = vrot.slane %v582, %v631
        %634 = vbcast.lane.b32.xlu0 %v632, 256
        %v635 = vpop.permute.xlu0 %634
        %v636 = vlaneseq
        %v637 = vshrl.u32 %v636, 7
        %v638 = vsub.s32 7, %v637
        %v639 = vrot.slane %v582, %v638
        %641 = vbcast.lane.b32.xlu0 %v639, 256
        %v642 = vpop.permute.xlu0 %641
        %v643 = vlaneseq
        %v644 = vshrl.u32 %v643, 7
        %v645 = vsub.s32 0, %v644
        %v646 = vrot.slane %v586, %v645
        %v647 = vmul.f32 %v593, %v646
        %v648 = vmul.f32 %v600, %v646
        %v649 = vmul.f32 %v607, %v646
        %v650 = vmul.f32 %v614, %v646
        %v651 = vmul.f32 %v621, %v646
        %v652 = vmul.f32 %v628, %v646
        %v653 = vmul.f32 %v635, %v646
        %v654 = vmul.f32 %v642, %v646
        %v655 = vlaneseq
        %v656 = vshrl.u32 %v655, 7
        %v657 = vsub.s32 0, %v656
        %v658 = vrot.slane %v585, %v657
        %660 = vbcast.lane.b32.xlu0 %v658, 256
        %v661 = vpop.permute.xlu0 %660
        %v662 = vlaneseq
        %v663 = vshrl.u32 %v662, 7
        %v664 = vsub.s32 1, %v663
        %v665 = vrot.slane %v585, %v664
        %667 = vbcast.lane.b32.xlu0 %v665, 256
        %v668 = vpop.permute.xlu0 %667
        %v669 = vlaneseq
        %v670 = vshrl.u32 %v669, 7
        %v671 = vsub.s32 2, %v670
        %v672 = vrot.slane %v585, %v671
        %674 = vbcast.lane.b32.xlu0 %v672, 256
        %v675 = vpop.permute.xlu0 %674
        %v676 = vlaneseq
        %v677 = vshrl.u32 %v676, 7
        %v678 = vsub.s32 3, %v677
        %v679 = vrot.slane %v585, %v678
        %681 = vbcast.lane.b32.xlu0 %v679, 256
        %v682 = vpop.permute.xlu0 %681
        %v683 = vlaneseq
        %v684 = vshrl.u32 %v683, 7
        %v685 = vsub.s32 4, %v684
        %v686 = vrot.slane %v585, %v685
        %688 = vbcast.lane.b32.xlu0 %v686, 256
        %v689 = vpop.permute.xlu0 %688
        %v690 = vlaneseq
        %v691 = vshrl.u32 %v690, 7
        %v692 = vsub.s32 5, %v691
        %v693 = vrot.slane %v585, %v692
        %695 = vbcast.lane.b32.xlu0 %v693, 256
        %v696 = vpop.permute.xlu0 %695
        %v697 = vlaneseq
        %v698 = vshrl.u32 %v697, 7
        %v699 = vsub.s32 6, %v698
        %v700 = vrot.slane %v585, %v699
        %702 = vbcast.lane.b32.xlu0 %v700, 256
        %v703 = vpop.permute.xlu0 %702
        %v704 = vlaneseq
        %v705 = vshrl.u32 %v704, 7
        %v706 = vsub.s32 7, %v705
        %v707 = vrot.slane %v585, %v706
        %709 = vbcast.lane.b32.xlu0 %v707, 256
        %v710 = vpop.permute.xlu0 %709
        %v711 = vlaneseq
        %v712 = vshrl.u32 %v711, 7
        %v713 = vsub.s32 1, %v712
        %v714 = vrot.slane %v586, %v713
        %v715 = vmul.f32 %v661, %v714
        %v716 = vmul.f32 %v668, %v714
        %v717 = vmul.f32 %v675, %v714
        %v718 = vmul.f32 %v682, %v714
        %v719 = vmul.f32 %v689, %v714
        %v720 = vmul.f32 %v696, %v714
        %v721 = vmul.f32 %v703, %v714
        %v722 = vmul.f32 %v710, %v714
        %v723 = vadd.f32 %v647, %v715
        %v724 = vadd.f32 %v648, %v716
        %v725 = vadd.f32 %v649, %v717
        %v726 = vadd.f32 %v650, %v718
        %v727 = vadd.f32 %v651, %v719
        %v728 = vadd.f32 %v652, %v720
        %v729 = vadd.f32 %v653, %v721
        %v730 = vadd.f32 %v654, %v722
        %v731 = vand.u32 2147483647, %v362
        %vm732 = vcmp.le.f32.partialorder %v731, 0.7853982
        %vm733 = vcmp.lt.s32.totalorder %v362, 0
        %v734 = vand.u32 %v362, 2139095040
        %v735 = vshrl.u32 %v734, 23
        %v736 = vsub.s32 %v735, 127
        %v737 = vand.u32 2147483647, %v362
        %v738 = vand.u32 %v737, 8388607
        %v739 = vor.u32 %v738, 8388608
        %v740 = vsub.s32 0, %v739
        %v741 = vadd.s32 %v736, 1
        %vm742 = vcmp.gt.s32.totalorder %v741, 0
        %v743 = vsel %vm742, %v741, 0
        %v744 = vshrl.u32 %v743, 5
        %v745 = vand.u32 %v743, 31
        %v746 = vsub.s32 32, %v745
        %v747 = vshrl.u32 683565275, %v746
        %v748 = vshll.u32 683565275, %v745
        %v749 = vshrl.u32 2475754826, %v746
        %v750 = vor.u32 %v748, %v749
        %v751 = vshll.u32 2475754826, %v745
        %v752 = vshrl.u32 2131351028, %v746
        %v753 = vor.u32 %v751, %v752
        %v754 = vshll.u32 2131351028, %v745
        %v755 = vshrl.u32 2102212464, %v746
        %v756 = vor.u32 %v754, %v755
        %v757 = vshll.u32 2102212464, %v745
        %v758 = vshrl.u32 920167782, %v746
        %v759 = vor.u32 %v757, %v758
        %v760 = vshll.u32 920167782, %v745
        %v761 = vshrl.u32 1326507024, %v746
        %v762 = vor.u32 %v760, %v761
        %vm763 = vcmp.lt.s32.totalorder %v744, 1
        %vm764 = vcmp.lt.s32.totalorder %v744, 2
        %vm765 = vcmp.lt.s32.totalorder %v744, 3
        %vm766 = vcmp.lt.s32.totalorder %v744, 4
        %v767 = vsel %vm763, %v747, %v750
        %v768 = vsel %vm766, %v756, 2102212464
        %v769 = vsel %vm765, %v753, %v768
        %v770 = vsel %vm764, %v767, %v769
        %v771 = vsel %vm763, %v750, %v753
        %v772 = vsel %vm766, %v759, 920167782
        %v773 = vsel %vm765, %v756, %v772
        %v774 = vsel %vm764, %v771, %v773
        %v775 = vsel %vm763, %v753, %v756
        %v776 = vsel %vm766, %v762, 1326507024
        %v777 = vsel %vm765, %v759, %v776
        %v778 = vsel %vm764, %v775, %v777
        %v779 = vshll.u32 %v739, 8
        %v780 = vmul.u32.u64.compose %v779, %v778
        %v781 = vextract.low.u32 %v780
        %v782 = vextract.high.u32 %v780
        %v783 = vmul.u32.u64.compose %v779, %v774
        %v784 = vextract.low.u32 %v783
        %v785 = vextract.high.u32 %v783
        %v786 = vmul.u32 %v779, %v770
        %v787 = vadd.s32 %v782, %v784
        %vm788 = vc.u32 %v782, %v784
        %v789 = vadd.s32 %v785, 1
        %v790 = vsel %vm788, %v789, %v785
        %v791 = vadd.s32 %v786, %v790
        %v792 = vadd.s32 %v791, 536870912
        %v793 = vshrl.u32 %v792, 30
        %v794 = vshll.u32 %v793, 30
        %v795 = vsub.s32 %v791, %v794
        %vm796 = vcmp.lt.s32.totalorder %v795, 0
        %v797 = vsub.s32 0, %v795
        %v798 = vsel %vm796, %v797, %v795
        %v799 = vclz %v798
        %v800 = vsub.s32 %v799, 2
        %vm801 = vcmp.gt.s32.totalorder 0, %v800
        %v802 = vsel %vm801, 0, %v800
        %v803 = vsub.s32 32, %v802
        %v804 = vshll.u32 %v795, %v802
        %v805 = vshrl.u32 %v787, %v803
        %v806 = vor.u32 %v804, %v805
        %v807 = vsub.s32 4294967266, %v802
        %v808 = vadd.s32 %v807, 127
        %v809 = vshll.u32 %v808, 23
        %v810 = vor.u32 4788187, %v809
        %v811 = vand.u32 2147483647, %v810
        %v813 = vcvt.s32.f32 %v806
        %v814 = vmul.f32 %v813, %v811
        %v815 = vxor.u32 %v814, 2147483648
        %v816 = vsel %vm733, %v815, %v814
        %v817 = vsub.s32 4, %v793
        %v818 = vsel %vm733, %v817, %v793
        %v819 = vsel %vm732, %v362, %v816
        %v820 = vsel %vm732, 0, %v818
        %v821 = vcosq.f32.pop %v819
        %v822 = vsinq.f32.pop %v819
        %vm823 = vweird.f32 %v362
        %v824 = vand.u32 %v820, 3
        %vm825 = vcmp.lt.s32.totalorder %v824, 2
        %vm826 = vcmp.eq.s32.totalorder %v824, 0
        %v827 = vxor.u32 %v822, 2147483648
        %v828 = vsel %vm826, %v821, %v827
        %vm829 = vcmp.eq.s32.totalorder %v824, 2
        %v830 = vxor.u32 %v821, 2147483648
        %v831 = vsel %vm829, %v830, %v822
        %v832 = vsel %vm825, %v828, %v831
        %v833 = vsel %vm823, nan, %v832
        %v834 = vlaneseq
        %v835 = vshrl.u32 %v834, 7
        %v836 = vsub.s32 0, %v835
        %v837 = vrot.slane %v833, %v836
        %839 = vbcast.lane.b32.xlu0 %v837, 256
        %v840 = vpop.permute.xlu0 %839
        %v841 = vlaneseq
        %v842 = vshrl.u32 %v841, 7
        %v843 = vsub.s32 1, %v842
        %v844 = vrot.slane %v833, %v843
        %846 = vbcast.lane.b32.xlu0 %v844, 256
        %v847 = vpop.permute.xlu0 %846
        %v848 = vlaneseq
        %v849 = vshrl.u32 %v848, 7
        %v850 = vsub.s32 2, %v849
        %v851 = vrot.slane %v833, %v850
        %853 = vbcast.lane.b32.xlu0 %v851, 256
        %v854 = vpop.permute.xlu0 %853
        %v855 = vlaneseq
        %v856 = vshrl.u32 %v855, 7
        %v857 = vsub.s32 3, %v856
        %v858 = vrot.slane %v833, %v857
        %860 = vbcast.lane.b32.xlu0 %v858, 256
        %v861 = vpop.permute.xlu0 %860
        %v862 = vlaneseq
        %v863 = vshrl.u32 %v862, 7
        %v864 = vsub.s32 4, %v863
        %v865 = vrot.slane %v833, %v864
        %867 = vbcast.lane.b32.xlu0 %v865, 256
        %v868 = vpop.permute.xlu0 %867
        %v869 = vlaneseq
        %v870 = vshrl.u32 %v869, 7
        %v871 = vsub.s32 5, %v870
        %v872 = vrot.slane %v833, %v871
        %874 = vbcast.lane.b32.xlu0 %v872, 256
        %v875 = vpop.permute.xlu0 %874
        %v876 = vlaneseq
        %v877 = vshrl.u32 %v876, 7
        %v878 = vsub.s32 6, %v877
        %v879 = vrot.slane %v833, %v878
        %881 = vbcast.lane.b32.xlu0 %v879, 256
        %v882 = vpop.permute.xlu0 %881
        %v883 = vlaneseq
        %v884 = vshrl.u32 %v883, 7
        %v885 = vsub.s32 7, %v884
        %v886 = vrot.slane %v833, %v885
        %888 = vbcast.lane.b32.xlu0 %v886, 256
        %v889 = vpop.permute.xlu0 %888
        %v890 = vlaneseq
        %v891 = vshrl.u32 %v890, 7
        %v892 = vsub.s32 2, %v891
        %v893 = vrot.slane %v586, %v892
        %v894 = vmul.f32 %v840, %v893
        %v895 = vmul.f32 %v847, %v893
        %v896 = vmul.f32 %v854, %v893
        %v897 = vmul.f32 %v861, %v893
        %v898 = vmul.f32 %v868, %v893
        %v899 = vmul.f32 %v875, %v893
        %v900 = vmul.f32 %v882, %v893
        %v901 = vmul.f32 %v889, %v893
        %v902 = vadd.f32 %v723, %v894
        %v903 = vadd.f32 %v724, %v895
        %v904 = vadd.f32 %v725, %v896
        %v905 = vadd.f32 %v726, %v897
        %v906 = vadd.f32 %v727, %v898
        %v907 = vadd.f32 %v728, %v899
        %v908 = vadd.f32 %v729, %v900
        %v909 = vadd.f32 %v730, %v901
        %v910 = vand.u32 2147483647, %v362
        %vm911 = vcmp.le.f32.partialorder %v910, 0.7853982
        %vm912 = vcmp.lt.s32.totalorder %v362, 0
        %v913 = vand.u32 %v362, 2139095040
        %v914 = vshrl.u32 %v913, 23
        %v915 = vsub.s32 %v914, 127
        %v916 = vand.u32 2147483647, %v362
        %v917 = vand.u32 %v916, 8388607
        %v918 = vor.u32 %v917, 8388608
        %v919 = vsub.s32 0, %v918
        %v920 = vadd.s32 %v915, 1
        %vm921 = vcmp.gt.s32.totalorder %v920, 0
        %v922 = vsel %vm921, %v920, 0
        %v923 = vshrl.u32 %v922, 5
        %v924 = vand.u32 %v922, 31
        %v925 = vsub.s32 32, %v924
        %v926 = vshrl.u32 683565275, %v925
        %v927 = vshll.u32 683565275, %v924
        %v928 = vshrl.u32 2475754826, %v925
        %v929 = vor.u32 %v927, %v928
        %v930 = vshll.u32 2475754826, %v924
        %v931 = vshrl.u32 2131351028, %v925
        %v932 = vor.u32 %v930, %v931
        %v933 = vshll.u32 2131351028, %v924
        %v934 = vshrl.u32 2102212464, %v925
        %v935 = vor.u32 %v933, %v934
        %v936 = vshll.u32 2102212464, %v924
        %v937 = vshrl.u32 920167782, %v925
        %v938 = vor.u32 %v936, %v937
        %v939 = vshll.u32 920167782, %v924
        %v940 = vshrl.u32 1326507024, %v925
        %v941 = vor.u32 %v939, %v940
        %vm942 = vcmp.lt.s32.totalorder %v923, 1
        %vm943 = vcmp.lt.s32.totalorder %v923, 2
        %vm944 = vcmp.lt.s32.totalorder %v923, 3
        %vm945 = vcmp.lt.s32.totalorder %v923, 4
        %v946 = vsel %vm942, %v926, %v929
        %v947 = vsel %vm945, %v935, 2102212464
        %v948 = vsel %vm944, %v932, %v947
        %v949 = vsel %vm943, %v946, %v948
        %v950 = vsel %vm942, %v929, %v932
        %v951 = vsel %vm945, %v938, 920167782
        %v952 = vsel %vm944, %v935, %v951
        %v953 = vsel %vm943, %v950, %v952
        %v954 = vsel %vm942, %v932, %v935
        %v955 = vsel %vm945, %v941, 1326507024
        %v956 = vsel %vm944, %v938, %v955
        %v957 = vsel %vm943, %v954, %v956
        %v958 = vshll.u32 %v918, 8
        %v959 = vmul.u32.u64.compose %v958, %v957
        %v960 = vextract.low.u32 %v959
        %v961 = vextract.high.u32 %v959
        %v962 = vmul.u32.u64.compose %v958, %v953
        %v963 = vextract.low.u32 %v962
        %v964 = vextract.high.u32 %v962
        %v965 = vmul.u32 %v958, %v949
        %v966 = vadd.s32 %v961, %v963
        %vm967 = vc.u32 %v961, %v963
        %v968 = vadd.s32 %v964, 1
        %v969 = vsel %vm967, %v968, %v964
        %v970 = vadd.s32 %v965, %v969
        %v971 = vadd.s32 %v970, 536870912
        %v972 = vshrl.u32 %v971, 30
        %v973 = vshll.u32 %v972, 30
        %v974 = vsub.s32 %v970, %v973
        %vm975 = vcmp.lt.s32.totalorder %v974, 0
        %v976 = vsub.s32 0, %v974
        %v977 = vsel %vm975, %v976, %v974
        %v978 = vclz %v977
        %v979 = vsub.s32 %v978, 2
        %vm980 = vcmp.gt.s32.totalorder 0, %v979
        %v981 = vsel %vm980, 0, %v979
        %v982 = vsub.s32 32, %v981
        %v983 = vshll.u32 %v974, %v981
        %v984 = vshrl.u32 %v966, %v982
        %v985 = vor.u32 %v983, %v984
        %v986 = vsub.s32 4294967266, %v981
        %v987 = vadd.s32 %v986, 127
        %v988 = vshll.u32 %v987, 23
        %v989 = vor.u32 4788187, %v988
        %v990 = vand.u32 2147483647, %v989
        %v992 = vcvt.s32.f32 %v985
        %v993 = vmul.f32 %v992, %v990
        %v994 = vxor.u32 %v993, 2147483648
        %v995 = vsel %vm912, %v994, %v993
        %v996 = vsub.s32 4, %v972
        %v997 = vsel %vm912, %v996, %v972
        %v998 = vsel %vm911, %v362, %v995
        %v999 = vsel %vm911, 0, %v997
        %v1000 = vcosq.f32.pop %v998
        %v1001 = vsinq.f32.pop %v998
        %vm1002 = vweird.f32 %v362
        %v1003 = vadd.s32 %v999, 3
        %v1004 = vand.u32 %v1003, 3
        %vm1005 = vcmp.lt.s32.totalorder %v1004, 2
        %vm1006 = vcmp.eq.s32.totalorder %v1004, 0
        %v1007 = vxor.u32 %v1001, 2147483648
        %v1008 = vsel %vm1006, %v1000, %v1007
        %vm1009 = vcmp.eq.s32.totalorder %v1004, 2
        %v1010 = vxor.u32 %v1000, 2147483648
        %v1011 = vsel %vm1009, %v1010, %v1001
        %v1012 = vsel %vm1005, %v1008, %v1011
        %v1013 = vsel %vm1002, nan, %v1012
        %v1014 = vlaneseq
        %v1015 = vshrl.u32 %v1014, 7
        %v1016 = vsub.s32 0, %v1015
        %v1017 = vrot.slane %v1013, %v1016
        %1019 = vbcast.lane.b32.xlu0 %v1017, 256
        %v1020 = vpop.permute.xlu0 %1019
        %v1021 = vlaneseq
        %v1022 = vshrl.u32 %v1021, 7
        %v1023 = vsub.s32 1, %v1022
        %v1024 = vrot.slane %v1013, %v1023
        %1026 = vbcast.lane.b32.xlu0 %v1024, 256
        %v1027 = vpop.permute.xlu0 %1026
        %v1028 = vlaneseq
        %v1029 = vshrl.u32 %v1028, 7
        %v1030 = vsub.s32 2, %v1029
        %v1031 = vrot.slane %v1013, %v1030
        %1033 = vbcast.lane.b32.xlu0 %v1031, 256
        %v1034 = vpop.permute.xlu0 %1033
        %v1035 = vlaneseq
        %v1036 = vshrl.u32 %v1035, 7
        %v1037 = vsub.s32 3, %v1036
        %v1038 = vrot.slane %v1013, %v1037
        %1040 = vbcast.lane.b32.xlu0 %v1038, 256
        %v1041 = vpop.permute.xlu0 %1040
        %v1042 = vlaneseq
        %v1043 = vshrl.u32 %v1042, 7
        %v1044 = vsub.s32 4, %v1043
        %v1045 = vrot.slane %v1013, %v1044
        %1047 = vbcast.lane.b32.xlu0 %v1045, 256
        %v1048 = vpop.permute.xlu0 %1047
        %v1049 = vlaneseq
        %v1050 = vshrl.u32 %v1049, 7
        %v1051 = vsub.s32 5, %v1050
        %v1052 = vrot.slane %v1013, %v1051
        %1054 = vbcast.lane.b32.xlu0 %v1052, 256
        %v1055 = vpop.permute.xlu0 %1054
        %v1056 = vlaneseq
        %v1057 = vshrl.u32 %v1056, 7
        %v1058 = vsub.s32 6, %v1057
        %v1059 = vrot.slane %v1013, %v1058
        %1061 = vbcast.lane.b32.xlu0 %v1059, 256
        %v1062 = vpop.permute.xlu0 %1061
        %v1063 = vlaneseq
        %v1064 = vshrl.u32 %v1063, 7
        %v1065 = vsub.s32 7, %v1064
        %v1066 = vrot.slane %v1013, %v1065
        %1068 = vbcast.lane.b32.xlu0 %v1066, 256
        %v1069 = vpop.permute.xlu0 %1068
        %v1070 = vlaneseq
        %v1071 = vshrl.u32 %v1070, 7
        %v1072 = vsub.s32 3, %v1071
        %v1073 = vrot.slane %v586, %v1072
        %v1074 = vmul.f32 %v1020, %v1073
        %v1075 = vmul.f32 %v1027, %v1073
        %v1076 = vmul.f32 %v1034, %v1073
        %v1077 = vmul.f32 %v1041, %v1073
        %v1078 = vmul.f32 %v1048, %v1073
        %v1079 = vmul.f32 %v1055, %v1073
        %v1080 = vmul.f32 %v1062, %v1073
        %v1081 = vmul.f32 %v1069, %v1073
        %v1082 = vadd.f32 %v902, %v1074
        %v1083 = vadd.f32 %v903, %v1075
        %v1084 = vadd.f32 %v904, %v1076
        %v1085 = vadd.f32 %v905, %v1077
        %v1086 = vadd.f32 %v906, %v1078
        %v1087 = vadd.f32 %v907, %v1079
        %v1088 = vadd.f32 %v908, %v1080
        %v1089 = vadd.f32 %v909, %v1081
        %v1090 = vld [vmem:[%s4] sm:$0xf]
        %vm1091 = vcmask 31744
        %v1093 = vsel %vm1091, %v327, 0
        %v1096 = vsel %vm1091, %v328, 0
        %v1099 = vsel %vm1091, %v329, 0
        %v1102 = vsel %vm1091, %v330, 0
        %v1105 = vsel %vm1091, %v331, 0
        %v1108 = vsel %vm1091, %v332, 0
        %v1111 = vsel %vm1091, %v333, 0
        %v1114 = vsel %vm1091, %v334, 0
        %vm1116 = vcmask 1043456
        %v1118 = vsel %vm1116, %v1090, 0
        %1120 = vmatprep.subr.mxu0 0.0
        %1121 = vmatpush1.msra.mxu0 0.0
        %1122 = vmatprep.subr.mxu0 0.0
        %1123 = vmatpush1.msra.mxu0 0.0
        %1124 = vmatprep.subr.mxu0 0.0
        %1125 = vmatpush1.msra.mxu0 0.0
        %1126 = vmatprep.subr.mxu0 0.0
        %1127 = vmatpush1.msra.mxu0 0.0
        %1128 = vmatprep.subr.mxu0 0.0
        %1129 = vmatpush1.msra.mxu0 0.0
        %1130 = vmatprep.subr.mxu0 0.0
        %1131 = vmatpush1.msra.mxu0 0.0
        %1132 = vmatprep.subr.mxu0 0.0
        %1133 = vmatpush1.msra.mxu0 0.0
        %1134 = vmatprep.subr.mxu0 0.0
        %1135 = vmatpush1.msra.mxu0 0.0
        %1136 = vmatprep.subr.mxu0 0.0
        %1137 = vmatpush1.msra.mxu0 0.0
        %1138 = vmatprep.subr.mxu0 0.0
        %1139 = vmatpush1.msra.mxu0 0.0
        %1140 = vmatprep.subr.mxu0 0.0
        %1141 = vmatpush1.msra.mxu0 0.0
        %1142 = vmatprep.subr.mxu0 0.0
        %1143 = vmatpush1.msra.mxu0 0.0
        %1144 = vmatprep.subr.mxu0 0.0
        %1145 = vmatpush1.msra.mxu0 0.0
        %1146 = vmatprep.subr.mxu0 0.0
        %1147 = vmatpush1.msra.mxu0 0.0
        %1148 = vmatprep.subr.mxu0 0.0
        %1149 = vmatpush1.msra.mxu0 0.0
        %1150 = vmatprep.subr.mxu0 0.0
        %v1151 = vand.u32 %v1118, 4294901760
        %1152 = vmatpush1.msra.mxu0 %v1151
        %1153 = vmatprep.subr.mxu0 0.0
        %1154 = vmatpush2.msra.mxu0 0.0
        %1155 = vmatprep.subr.mxu0 0.0
        %1156 = vmatpush2.msra.mxu0 0.0
        %1157 = vmatprep.subr.mxu0 0.0
        %1158 = vmatpush2.msra.mxu0 0.0
        %1159 = vmatprep.subr.mxu0 0.0
        %1160 = vmatpush2.msra.mxu0 0.0
        %1161 = vmatprep.subr.mxu0 0.0
        %1162 = vmatpush2.msra.mxu0 0.0
        %1163 = vmatprep.subr.mxu0 0.0
        %1164 = vmatpush2.msra.mxu0 0.0
        %1165 = vmatprep.subr.mxu0 0.0
        %1166 = vmatpush2.msra.mxu0 0.0
        %1167 = vmatprep.subr.mxu0 0.0
        %1168 = vmatpush2.msra.mxu0 0.0
        %1169 = vmatprep.subr.mxu0 0.0
        %1170 = vmatpush2.msra.mxu0 0.0
        %1171 = vmatprep.subr.mxu0 0.0
        %1172 = vmatpush2.msra.mxu0 0.0
        %1173 = vmatprep.subr.mxu0 0.0
        %1174 = vmatpush2.msra.mxu0 0.0
        %1175 = vmatprep.subr.mxu0 0.0
        %1176 = vmatpush2.msra.mxu0 0.0
        %1177 = vmatprep.subr.mxu0 0.0
        %1178 = vmatpush2.msra.mxu0 0.0
        %1179 = vmatprep.subr.mxu0 0.0
        %1180 = vmatpush2.msra.mxu0 0.0
        %1181 = vmatprep.subr.mxu0 0.0
        %1182 = vmatpush2.msra.mxu0 0.0
        %1183 = vmatprep.subr.mxu0 0.0
        %1184 = vmatpush2.msra.mxu0 0.0
        %1185 = vmatprep.mubr.f32.mxu0 0.0
        %v1186 = vand.u32 %v1093, 4294901760
        %v1187 = vsub.f32 %v1093, %v1186
        %v1188 = vand.u32 %v1187, 4294901760
        %v1189 = vsub.f32 %v1187, %v1188
        %v1190 = vand.u32 %v1189, 4294901760
        %1191 = vmatmul.mubr.f32.gmra.mxu0 %v1190
        %v1192 = vpop.f32.mrf.mxu0
        %v1193 = vadd.f32 0.0, %v1192
        %v1194 = vpop.f32.mrf.mxu0
        %1195 = vmatprep.mubr.f32.mxu0 0.0
        %v1196 = vand.u32 %v1096, 4294901760
        %v1197 = vsub.f32 %v1096, %v1196
        %v1198 = vand.u32 %v1197, 4294901760
        %v1199 = vsub.f32 %v1197, %v1198
        %v1200 = vand.u32 %v1199, 4294901760
        %1201 = vmatmul.mubr.f32.gmra.mxu0 %v1200
        %v1202 = vpop.f32.mrf.mxu0
        %v1203 = vadd.f32 0.0, %v1202
        %v1204 = vpop.f32.mrf.mxu0
        %1205 = vmatprep.mubr.f32.mxu0 0.0
        %v1206 = vand.u32 %v1099, 4294901760
        %v1207 = vsub.f32 %v1099, %v1206
        %v1208 = vand.u32 %v1207, 4294901760
        %v1209 = vsub.f32 %v1207, %v1208
        %v1210 = vand.u32 %v1209, 4294901760
        %1211 = vmatmul.mubr.f32.gmra.mxu0 %v1210
        %v1212 = vpop.f32.mrf.mxu0
        %v1213 = vadd.f32 0.0, %v1212
        %v1214 = vpop.f32.mrf.mxu0
        %1215 = vmatprep.mubr.f32.mxu0 0.0
        %v1216 = vand.u32 %v1102, 4294901760
        %v1217 = vsub.f32 %v1102, %v1216
        %v1218 = vand.u32 %v1217, 4294901760
        %v1219 = vsub.f32 %v1217, %v1218
        %v1220 = vand.u32 %v1219, 4294901760
        %1221 = vmatmul.mubr.f32.gmra.mxu0 %v1220
        %v1222 = vpop.f32.mrf.mxu0
        %v1223 = vadd.f32 0.0, %v1222
        %v1224 = vpop.f32.mrf.mxu0
        %1225 = vmatprep.mubr.f32.mxu0 0.0
        %v1226 = vand.u32 %v1105, 4294901760
        %v1227 = vsub.f32 %v1105, %v1226
        %v1228 = vand.u32 %v1227, 4294901760
        %v1229 = vsub.f32 %v1227, %v1228
        %v1230 = vand.u32 %v1229, 4294901760
        %1231 = vmatmul.mubr.f32.gmra.mxu0 %v1230
        %v1232 = vpop.f32.mrf.mxu0
        %v1233 = vadd.f32 0.0, %v1232
        %v1234 = vpop.f32.mrf.mxu0
        %1235 = vmatprep.mubr.f32.mxu0 0.0
        %v1236 = vand.u32 %v1108, 4294901760
        %v1237 = vsub.f32 %v1108, %v1236
        %v1238 = vand.u32 %v1237, 4294901760
        %v1239 = vsub.f32 %v1237, %v1238
        %v1240 = vand.u32 %v1239, 4294901760
        %1241 = vmatmul.mubr.f32.gmra.mxu0 %v1240
        %v1242 = vpop.f32.mrf.mxu0
        %v1243 = vadd.f32 0.0, %v1242
        %v1244 = vpop.f32.mrf.mxu0
        %1245 = vmatprep.mubr.f32.mxu0 0.0
        %v1246 = vand.u32 %v1111, 4294901760
        %v1247 = vsub.f32 %v1111, %v1246
        %v1248 = vand.u32 %v1247, 4294901760
        %v1249 = vsub.f32 %v1247, %v1248
        %v1250 = vand.u32 %v1249, 4294901760
        %1251 = vmatmul.mubr.f32.gmra.mxu0 %v1250
        %v1252 = vpop.f32.mrf.mxu0
        %v1253 = vadd.f32 0.0, %v1252
        %v1254 = vpop.f32.mrf.mxu0
        %1255 = vmatprep.mubr.f32.mxu0 0.0
        %v1256 = vand.u32 %v1114, 4294901760
        %v1257 = vsub.f32 %v1114, %v1256
        %v1258 = vand.u32 %v1257, 4294901760
        %v1259 = vsub.f32 %v1257, %v1258
        %v1260 = vand.u32 %v1259, 4294901760
        %1261 = vmatmul.mubr.f32.gmra.mxu0 %v1260
        %v1262 = vpop.f32.mrf.mxu0
        %v1263 = vadd.f32 0.0, %v1262
        %v1264 = vpop.f32.mrf.mxu0
        %1265 = vdwg.mxu0
        %1266 = vmatprep.subr.mxu0 0.0
        %1267 = vmatpush1.msra.mxu0 0.0
        %1268 = vmatprep.subr.mxu0 0.0
        %1269 = vmatpush1.msra.mxu0 0.0
        %1270 = vmatprep.subr.mxu0 0.0
        %1271 = vmatpush1.msra.mxu0 0.0
        %1272 = vmatprep.subr.mxu0 0.0
        %1273 = vmatpush1.msra.mxu0 0.0
        %1274 = vmatprep.subr.mxu0 0.0
        %1275 = vmatpush1.msra.mxu0 0.0
        %1276 = vmatprep.subr.mxu0 0.0
        %1277 = vmatpush1.msra.mxu0 0.0
        %1278 = vmatprep.subr.mxu0 0.0
        %1279 = vmatpush1.msra.mxu0 0.0
        %1280 = vmatprep.subr.mxu0 0.0
        %1281 = vmatpush1.msra.mxu0 0.0
        %1282 = vmatprep.subr.mxu0 0.0
        %1283 = vmatpush1.msra.mxu0 0.0
        %1284 = vmatprep.subr.mxu0 0.0
        %1285 = vmatpush1.msra.mxu0 0.0
        %1286 = vmatprep.subr.mxu0 0.0
        %1287 = vmatpush1.msra.mxu0 0.0
        %1288 = vmatprep.subr.mxu0 0.0
        %1289 = vmatpush1.msra.mxu0 0.0
        %1290 = vmatprep.subr.mxu0 0.0
        %1291 = vmatpush1.msra.mxu0 0.0
        %1292 = vmatprep.subr.mxu0 0.0
        %1293 = vmatpush1.msra.mxu0 0.0
        %1294 = vmatprep.subr.mxu0 0.0
        %1295 = vmatpush1.msra.mxu0 0.0
        %1296 = vmatprep.subr.mxu0 0.0
        %v1297 = vand.u32 %v1118, 4294901760
        %v1298 = vsub.f32 %v1118, %v1297
        %v1299 = vand.u32 %v1298, 4294901760
        %v1300 = vsub.f32 %v1298, %v1299
        %v1301 = vand.u32 %v1300, 4294901760
        %1302 = vmatpush1.msra.mxu0 %v1301
        %1303 = vmatprep.subr.mxu0 0.0
        %1304 = vmatpush2.msra.mxu0 0.0
        %1305 = vmatprep.subr.mxu0 0.0
        %1306 = vmatpush2.msra.mxu0 0.0
        %1307 = vmatprep.subr.mxu0 0.0
        %1308 = vmatpush2.msra.mxu0 0.0
        %1309 = vmatprep.subr.mxu0 0.0
        %1310 = vmatpush2.msra.mxu0 0.0
        %1311 = vmatprep.subr.mxu0 0.0
        %1312 = vmatpush2.msra.mxu0 0.0
        %1313 = vmatprep.subr.mxu0 0.0
        %1314 = vmatpush2.msra.mxu0 0.0
        %1315 = vmatprep.subr.mxu0 0.0
        %1316 = vmatpush2.msra.mxu0 0.0
        %1317 = vmatprep.subr.mxu0 0.0
        %1318 = vmatpush2.msra.mxu0 0.0
        %1319 = vmatprep.subr.mxu0 0.0
        %1320 = vmatpush2.msra.mxu0 0.0
        %1321 = vmatprep.subr.mxu0 0.0
        %1322 = vmatpush2.msra.mxu0 0.0
        %1323 = vmatprep.subr.mxu0 0.0
        %1324 = vmatpush2.msra.mxu0 0.0
        %1325 = vmatprep.subr.mxu0 0.0
        %1326 = vmatpush2.msra.mxu0 0.0
        %1327 = vmatprep.subr.mxu0 0.0
        %1328 = vmatpush2.msra.mxu0 0.0
        %1329 = vmatprep.subr.mxu0 0.0
        %1330 = vmatpush2.msra.mxu0 0.0
        %1331 = vmatprep.subr.mxu0 0.0
        %1332 = vmatpush2.msra.mxu0 0.0
        %1333 = vmatprep.subr.mxu0 0.0
        %1334 = vmatpush2.msra.mxu0 0.0
        %1335 = vmatprep.mubr.f32.mxu0 0.0
        %v1336 = vand.u32 %v1093, 4294901760
        %1337 = vmatmul.mubr.f32.gmra.mxu0 %v1336
        %v1338 = vpop.f32.mrf.mxu0
        %v1339 = vadd.f32 %v1193, %v1338
        %v1340 = vpop.f32.mrf.mxu0
        %1341 = vmatprep.mubr.f32.mxu0 0.0
        %v1342 = vand.u32 %v1096, 4294901760
        %1343 = vmatmul.mubr.f32.gmra.mxu0 %v1342
        %v1344 = vpop.f32.mrf.mxu0
        %v1345 = vadd.f32 %v1203, %v1344
        %v1346 = vpop.f32.mrf.mxu0
        %1347 = vmatprep.mubr.f32.mxu0 0.0
        %v1348 = vand.u32 %v1099, 4294901760
        %1349 = vmatmul.mubr.f32.gmra.mxu0 %v1348
        %v1350 = vpop.f32.mrf.mxu0
        %v1351 = vadd.f32 %v1213, %v1350
        %v1352 = vpop.f32.mrf.mxu0
        %1353 = vmatprep.mubr.f32.mxu0 0.0
        %v1354 = vand.u32 %v1102, 4294901760
        %1355 = vmatmul.mubr.f32.gmra.mxu0 %v1354
        %v1356 = vpop.f32.mrf.mxu0
        %v1357 = vadd.f32 %v1223, %v1356
        %v1358 = vpop.f32.mrf.mxu0
        %1359 = vmatprep.mubr.f32.mxu0 0.0
        %v1360 = vand.u32 %v1105, 4294901760
        %1361 = vmatmul.mubr.f32.gmra.mxu0 %v1360
        %v1362 = vpop.f32.mrf.mxu0
        %v1363 = vadd.f32 %v1233, %v1362
        %v1364 = vpop.f32.mrf.mxu0
        %1365 = vmatprep.mubr.f32.mxu0 0.0
        %v1366 = vand.u32 %v1108, 4294901760
        %1367 = vmatmul.mubr.f32.gmra.mxu0 %v1366
        %v1368 = vpop.f32.mrf.mxu0
        %v1369 = vadd.f32 %v1243, %v1368
        %v1370 = vpop.f32.mrf.mxu0
        %1371 = vmatprep.mubr.f32.mxu0 0.0
        %v1372 = vand.u32 %v1111, 4294901760
        %1373 = vmatmul.mubr.f32.gmra.mxu0 %v1372
        %v1374 = vpop.f32.mrf.mxu0
        %v1375 = vadd.f32 %v1253, %v1374
        %v1376 = vpop.f32.mrf.mxu0
        %1377 = vmatprep.mubr.f32.mxu0 0.0
        %v1378 = vand.u32 %v1114, 4294901760
        %1379 = vmatmul.mubr.f32.gmra.mxu0 %v1378
        %v1380 = vpop.f32.mrf.mxu0
        %v1381 = vadd.f32 %v1263, %v1380
        %v1382 = vpop.f32.mrf.mxu0
        %1383 = vdwg.mxu0
        %1384 = vmatprep.subr.mxu0 0.0
        %1385 = vmatpush1.msra.mxu0 0.0
        %1386 = vmatprep.subr.mxu0 0.0
        %1387 = vmatpush1.msra.mxu0 0.0
        %1388 = vmatprep.subr.mxu0 0.0
        %1389 = vmatpush1.msra.mxu0 0.0
        %1390 = vmatprep.subr.mxu0 0.0
        %1391 = vmatpush1.msra.mxu0 0.0
        %1392 = vmatprep.subr.mxu0 0.0
        %1393 = vmatpush1.msra.mxu0 0.0
        %1394 = vmatprep.subr.mxu0 0.0
        %1395 = vmatpush1.msra.mxu0 0.0
        %1396 = vmatprep.subr.mxu0 0.0
        %1397 = vmatpush1.msra.mxu0 0.0
        %1398 = vmatprep.subr.mxu0 0.0
        %1399 = vmatpush1.msra.mxu0 0.0
        %1400 = vmatprep.subr.mxu0 0.0
        %1401 = vmatpush1.msra.mxu0 0.0
        %1402 = vmatprep.subr.mxu0 0.0
        %1403 = vmatpush1.msra.mxu0 0.0
        %1404 = vmatprep.subr.mxu0 0.0
        %1405 = vmatpush1.msra.mxu0 0.0
        %1406 = vmatprep.subr.mxu0 0.0
        %1407 = vmatpush1.msra.mxu0 0.0
        %1408 = vmatprep.subr.mxu0 0.0
        %1409 = vmatpush1.msra.mxu0 0.0
        %1410 = vmatprep.subr.mxu0 0.0
        %1411 = vmatpush1.msra.mxu0 0.0
        %1412 = vmatprep.subr.mxu0 0.0
        %1413 = vmatpush1.msra.mxu0 0.0
        %1414 = vmatprep.subr.mxu0 0.0
        %v1415 = vand.u32 %v1118, 4294901760
        %v1416 = vsub.f32 %v1118, %v1415
        %1417 = vmatpush1.msra.mxu0 %v1416
        %1418 = vmatprep.subr.mxu0 0.0
        %1419 = vmatpush2.msra.mxu0 0.0
        %1420 = vmatprep.subr.mxu0 0.0
        %1421 = vmatpush2.msra.mxu0 0.0
        %1422 = vmatprep.subr.mxu0 0.0
        %1423 = vmatpush2.msra.mxu0 0.0
        %1424 = vmatprep.subr.mxu0 0.0
        %1425 = vmatpush2.msra.mxu0 0.0
        %1426 = vmatprep.subr.mxu0 0.0
        %1427 = vmatpush2.msra.mxu0 0.0
        %1428 = vmatprep.subr.mxu0 0.0
        %1429 = vmatpush2.msra.mxu0 0.0
        %1430 = vmatprep.subr.mxu0 0.0
        %1431 = vmatpush2.msra.mxu0 0.0
        %1432 = vmatprep.subr.mxu0 0.0
        %1433 = vmatpush2.msra.mxu0 0.0
        %1434 = vmatprep.subr.mxu0 0.0
        %1435 = vmatpush2.msra.mxu0 0.0
        %1436 = vmatprep.subr.mxu0 0.0
        %1437 = vmatpush2.msra.mxu0 0.0
        %1438 = vmatprep.subr.mxu0 0.0
        %1439 = vmatpush2.msra.mxu0 0.0
        %1440 = vmatprep.subr.mxu0 0.0
        %1441 = vmatpush2.msra.mxu0 0.0
        %1442 = vmatprep.subr.mxu0 0.0
        %1443 = vmatpush2.msra.mxu0 0.0
        %1444 = vmatprep.subr.mxu0 0.0
        %1445 = vmatpush2.msra.mxu0 0.0
        %1446 = vmatprep.subr.mxu0 0.0
        %1447 = vmatpush2.msra.mxu0 0.0
        %1448 = vmatprep.subr.mxu0 0.0
        %1449 = vmatpush2.msra.mxu0 0.0
        %1450 = vmatprep.mubr.f32.mxu0 0.0
        %v1451 = vand.u32 %v1093, 4294901760
        %v1452 = vsub.f32 %v1093, %v1451
        %1453 = vmatmul.mubr.f32.gmra.mxu0 %v1452
        %v1454 = vpop.f32.mrf.mxu0
        %v1455 = vadd.f32 %v1339, %v1454
        %v1456 = vpop.f32.mrf.mxu0
        %1457 = vmatprep.mubr.f32.mxu0 0.0
        %v1458 = vand.u32 %v1096, 4294901760
        %v1459 = vsub.f32 %v1096, %v1458
        %1460 = vmatmul.mubr.f32.gmra.mxu0 %v1459
        %v1461 = vpop.f32.mrf.mxu0
        %v1462 = vadd.f32 %v1345, %v1461
        %v1463 = vpop.f32.mrf.mxu0
        %1464 = vmatprep.mubr.f32.mxu0 0.0
        %v1465 = vand.u32 %v1099, 4294901760
        %v1466 = vsub.f32 %v1099, %v1465
        %1467 = vmatmul.mubr.f32.gmra.mxu0 %v1466
        %v1468 = vpop.f32.mrf.mxu0
        %v1469 = vadd.f32 %v1351, %v1468
        %v1470 = vpop.f32.mrf.mxu0
        %1471 = vmatprep.mubr.f32.mxu0 0.0
        %v1472 = vand.u32 %v1102, 4294901760
        %v1473 = vsub.f32 %v1102, %v1472
        %1474 = vmatmul.mubr.f32.gmra.mxu0 %v1473
        %v1475 = vpop.f32.mrf.mxu0
        %v1476 = vadd.f32 %v1357, %v1475
        %v1477 = vpop.f32.mrf.mxu0
        %1478 = vmatprep.mubr.f32.mxu0 0.0
        %v1479 = vand.u32 %v1105, 4294901760
        %v1480 = vsub.f32 %v1105, %v1479
        %1481 = vmatmul.mubr.f32.gmra.mxu0 %v1480
        %v1482 = vpop.f32.mrf.mxu0
        %v1483 = vadd.f32 %v1363, %v1482
        %v1484 = vpop.f32.mrf.mxu0
        %1485 = vmatprep.mubr.f32.mxu0 0.0
        %v1486 = vand.u32 %v1108, 4294901760
        %v1487 = vsub.f32 %v1108, %v1486
        %1488 = vmatmul.mubr.f32.gmra.mxu0 %v1487
        %v1489 = vpop.f32.mrf.mxu0
        %v1490 = vadd.f32 %v1369, %v1489
        %v1491 = vpop.f32.mrf.mxu0
        %1492 = vmatprep.mubr.f32.mxu0 0.0
        %v1493 = vand.u32 %v1111, 4294901760
        %v1494 = vsub.f32 %v1111, %v1493
        %1495 = vmatmul.mubr.f32.gmra.mxu0 %v1494
        %v1496 = vpop.f32.mrf.mxu0
        %v1497 = vadd.f32 %v1375, %v1496
        %v1498 = vpop.f32.mrf.mxu0
        %1499 = vmatprep.mubr.f32.mxu0 0.0
        %v1500 = vand.u32 %v1114, 4294901760
        %v1501 = vsub.f32 %v1114, %v1500
        %1502 = vmatmul.mubr.f32.gmra.mxu0 %v1501
        %v1503 = vpop.f32.mrf.mxu0
        %v1504 = vadd.f32 %v1381, %v1503
        %v1505 = vpop.f32.mrf.mxu0
        %1506 = vdwg.mxu0
        %1507 = vmatprep.subr.mxu0 0.0
        %1508 = vmatpush1.msra.mxu0 0.0
        %1509 = vmatprep.subr.mxu0 0.0
        %1510 = vmatpush1.msra.mxu0 0.0
        %1511 = vmatprep.subr.mxu0 0.0
        %1512 = vmatpush1.msra.mxu0 0.0
        %1513 = vmatprep.subr.mxu0 0.0
        %1514 = vmatpush1.msra.mxu0 0.0
        %1515 = vmatprep.subr.mxu0 0.0
        %1516 = vmatpush1.msra.mxu0 0.0
        %1517 = vmatprep.subr.mxu0 0.0
        %1518 = vmatpush1.msra.mxu0 0.0
        %1519 = vmatprep.subr.mxu0 0.0
        %1520 = vmatpush1.msra.mxu0 0.0
        %1521 = vmatprep.subr.mxu0 0.0
        %1522 = vmatpush1.msra.mxu0 0.0
        %1523 = vmatprep.subr.mxu0 0.0
        %1524 = vmatpush1.msra.mxu0 0.0
        %1525 = vmatprep.subr.mxu0 0.0
        %1526 = vmatpush1.msra.mxu0 0.0
        %1527 = vmatprep.subr.mxu0 0.0
        %1528 = vmatpush1.msra.mxu0 0.0
        %1529 = vmatprep.subr.mxu0 0.0
        %1530 = vmatpush1.msra.mxu0 0.0
        %1531 = vmatprep.subr.mxu0 0.0
        %1532 = vmatpush1.msra.mxu0 0.0
        %1533 = vmatprep.subr.mxu0 0.0
        %1534 = vmatpush1.msra.mxu0 0.0
        %1535 = vmatprep.subr.mxu0 0.0
        %1536 = vmatpush1.msra.mxu0 0.0
        %1537 = vmatprep.subr.mxu0 0.0
        %v1538 = vand.u32 %v1118, 4294901760
        %1539 = vmatpush1.msra.mxu0 %v1538
        %1540 = vmatprep.subr.mxu0 0.0
        %1541 = vmatpush2.msra.mxu0 0.0
        %1542 = vmatprep.subr.mxu0 0.0
        %1543 = vmatpush2.msra.mxu0 0.0
        %1544 = vmatprep.subr.mxu0 0.0
        %1545 = vmatpush2.msra.mxu0 0.0
        %1546 = vmatprep.subr.mxu0 0.0
        %1547 = vmatpush2.msra.mxu0 0.0
        %1548 = vmatprep.subr.mxu0 0.0
        %1549 = vmatpush2.msra.mxu0 0.0
        %1550 = vmatprep.subr.mxu0 0.0
        %1551 = vmatpush2.msra.mxu0 0.0
        %1552 = vmatprep.subr.mxu0 0.0
        %1553 = vmatpush2.msra.mxu0 0.0
        %1554 = vmatprep.subr.mxu0 0.0
        %1555 = vmatpush2.msra.mxu0 0.0
        %1556 = vmatprep.subr.mxu0 0.0
        %1557 = vmatpush2.msra.mxu0 0.0
        %1558 = vmatprep.subr.mxu0 0.0
        %1559 = vmatpush2.msra.mxu0 0.0
        %1560 = vmatprep.subr.mxu0 0.0
        %1561 = vmatpush2.msra.mxu0 0.0
        %1562 = vmatprep.subr.mxu0 0.0
        %1563 = vmatpush2.msra.mxu0 0.0
        %1564 = vmatprep.subr.mxu0 0.0
        %1565 = vmatpush2.msra.mxu0 0.0
        %1566 = vmatprep.subr.mxu0 0.0
        %1567 = vmatpush2.msra.mxu0 0.0
        %1568 = vmatprep.subr.mxu0 0.0
        %1569 = vmatpush2.msra.mxu0 0.0
        %1570 = vmatprep.subr.mxu0 0.0
        %1571 = vmatpush2.msra.mxu0 0.0
        %1572 = vmatprep.mubr.f32.mxu0 0.0
        %v1573 = vand.u32 %v1093, 4294901760
        %v1574 = vsub.f32 %v1093, %v1573
        %v1575 = vand.u32 %v1574, 4294901760
        %1576 = vmatmul.mubr.f32.gmra.mxu0 %v1575
        %v1577 = vpop.f32.mrf.mxu0
        %v1578 = vadd.f32 %v1455, %v1577
        %v1579 = vpop.f32.mrf.mxu0
        %1580 = vmatprep.mubr.f32.mxu0 0.0
        %v1581 = vand.u32 %v1096, 4294901760
        %v1582 = vsub.f32 %v1096, %v1581
        %v1583 = vand.u32 %v1582, 4294901760
        %1584 = vmatmul.mubr.f32.gmra.mxu0 %v1583
        %v1585 = vpop.f32.mrf.mxu0
        %v1586 = vadd.f32 %v1462, %v1585
        %v1587 = vpop.f32.mrf.mxu0
        %1588 = vmatprep.mubr.f32.mxu0 0.0
        %v1589 = vand.u32 %v1099, 4294901760
        %v1590 = vsub.f32 %v1099, %v1589
        %v1591 = vand.u32 %v1590, 4294901760
        %1592 = vmatmul.mubr.f32.gmra.mxu0 %v1591
        %v1593 = vpop.f32.mrf.mxu0
        %v1594 = vadd.f32 %v1469, %v1593
        %v1595 = vpop.f32.mrf.mxu0
        %1596 = vmatprep.mubr.f32.mxu0 0.0
        %v1597 = vand.u32 %v1102, 4294901760
        %v1598 = vsub.f32 %v1102, %v1597
        %v1599 = vand.u32 %v1598, 4294901760
        %1600 = vmatmul.mubr.f32.gmra.mxu0 %v1599
        %v1601 = vpop.f32.mrf.mxu0
        %v1602 = vadd.f32 %v1476, %v1601
        %v1603 = vpop.f32.mrf.mxu0
        %1604 = vmatprep.mubr.f32.mxu0 0.0
        %v1605 = vand.u32 %v1105, 4294901760
        %v1606 = vsub.f32 %v1105, %v1605
        %v1607 = vand.u32 %v1606, 4294901760
        %1608 = vmatmul.mubr.f32.gmra.mxu0 %v1607
        %v1609 = vpop.f32.mrf.mxu0
        %v1610 = vadd.f32 %v1483, %v1609
        %v1611 = vpop.f32.mrf.mxu0
        %1612 = vmatprep.mubr.f32.mxu0 0.0
        %v1613 = vand.u32 %v1108, 4294901760
        %v1614 = vsub.f32 %v1108, %v1613
        %v1615 = vand.u32 %v1614, 4294901760
        %1616 = vmatmul.mubr.f32.gmra.mxu0 %v1615
        %v1617 = vpop.f32.mrf.mxu0
        %v1618 = vadd.f32 %v1490, %v1617
        %v1619 = vpop.f32.mrf.mxu0
        %1620 = vmatprep.mubr.f32.mxu0 0.0
        %v1621 = vand.u32 %v1111, 4294901760
        %v1622 = vsub.f32 %v1111, %v1621
        %v1623 = vand.u32 %v1622, 4294901760
        %1624 = vmatmul.mubr.f32.gmra.mxu0 %v1623
        %v1625 = vpop.f32.mrf.mxu0
        %v1626 = vadd.f32 %v1497, %v1625
        %v1627 = vpop.f32.mrf.mxu0
        %1628 = vmatprep.mubr.f32.mxu0 0.0
        %v1629 = vand.u32 %v1114, 4294901760
        %v1630 = vsub.f32 %v1114, %v1629
        %v1631 = vand.u32 %v1630, 4294901760
        %1632 = vmatmul.mubr.f32.gmra.mxu0 %v1631
        %v1633 = vpop.f32.mrf.mxu0
        %v1634 = vadd.f32 %v1504, %v1633
        %v1635 = vpop.f32.mrf.mxu0
        %1636 = vdwg.mxu0
        %1637 = vmatprep.subr.mxu0 0.0
        %1638 = vmatpush1.msra.mxu0 0.0
        %1639 = vmatprep.subr.mxu0 0.0
        %1640 = vmatpush1.msra.mxu0 0.0
        %1641 = vmatprep.subr.mxu0 0.0
        %1642 = vmatpush1.msra.mxu0 0.0
        %1643 = vmatprep.subr.mxu0 0.0
        %1644 = vmatpush1.msra.mxu0 0.0
        %1645 = vmatprep.subr.mxu0 0.0
        %1646 = vmatpush1.msra.mxu0 0.0
        %1647 = vmatprep.subr.mxu0 0.0
        %1648 = vmatpush1.msra.mxu0 0.0
        %1649 = vmatprep.subr.mxu0 0.0
        %1650 = vmatpush1.msra.mxu0 0.0
        %1651 = vmatprep.subr.mxu0 0.0
        %1652 = vmatpush1.msra.mxu0 0.0
        %1653 = vmatprep.subr.mxu0 0.0
        %1654 = vmatpush1.msra.mxu0 0.0
        %1655 = vmatprep.subr.mxu0 0.0
        %1656 = vmatpush1.msra.mxu0 0.0
        %1657 = vmatprep.subr.mxu0 0.0
        %1658 = vmatpush1.msra.mxu0 0.0
        %1659 = vmatprep.subr.mxu0 0.0
        %1660 = vmatpush1.msra.mxu0 0.0
        %1661 = vmatprep.subr.mxu0 0.0
        %1662 = vmatpush1.msra.mxu0 0.0
        %1663 = vmatprep.subr.mxu0 0.0
        %1664 = vmatpush1.msra.mxu0 0.0
        %1665 = vmatprep.subr.mxu0 0.0
        %1666 = vmatpush1.msra.mxu0 0.0
        %1667 = vmatprep.subr.mxu0 0.0
        %v1668 = vand.u32 %v1118, 4294901760
        %v1669 = vsub.f32 %v1118, %v1668
        %v1670 = vand.u32 %v1669, 4294901760
        %1671 = vmatpush1.msra.mxu0 %v1670
        %1672 = vmatprep.subr.mxu0 0.0
        %1673 = vmatpush2.msra.mxu0 0.0
        %1674 = vmatprep.subr.mxu0 0.0
        %1675 = vmatpush2.msra.mxu0 0.0
        %1676 = vmatprep.subr.mxu0 0.0
        %1677 = vmatpush2.msra.mxu0 0.0
        %1678 = vmatprep.subr.mxu0 0.0
        %1679 = vmatpush2.msra.mxu0 0.0
        %1680 = vmatprep.subr.mxu0 0.0
        %1681 = vmatpush2.msra.mxu0 0.0
        %1682 = vmatprep.subr.mxu0 0.0
        %1683 = vmatpush2.msra.mxu0 0.0
        %1684 = vmatprep.subr.mxu0 0.0
        %1685 = vmatpush2.msra.mxu0 0.0
        %1686 = vmatprep.subr.mxu0 0.0
        %1687 = vmatpush2.msra.mxu0 0.0
        %1688 = vmatprep.subr.mxu0 0.0
        %1689 = vmatpush2.msra.mxu0 0.0
        %1690 = vmatprep.subr.mxu0 0.0
        %1691 = vmatpush2.msra.mxu0 0.0
        %1692 = vmatprep.subr.mxu0 0.0
        %1693 = vmatpush2.msra.mxu0 0.0
        %1694 = vmatprep.subr.mxu0 0.0
        %1695 = vmatpush2.msra.mxu0 0.0
        %1696 = vmatprep.subr.mxu0 0.0
        %1697 = vmatpush2.msra.mxu0 0.0
        %1698 = vmatprep.subr.mxu0 0.0
        %1699 = vmatpush2.msra.mxu0 0.0
        %1700 = vmatprep.subr.mxu0 0.0
        %1701 = vmatpush2.msra.mxu0 0.0
        %1702 = vmatprep.subr.mxu0 0.0
        %1703 = vmatpush2.msra.mxu0 0.0
        %1704 = vmatprep.mubr.f32.mxu0 0.0
        %v1705 = vand.u32 %v1093, 4294901760
        %1706 = vmatmul.mubr.f32.gmra.mxu0 %v1705
        %v1707 = vpop.f32.mrf.mxu0
        %v1708 = vadd.f32 %v1578, %v1707
        %v1709 = vpop.f32.mrf.mxu0
        %1710 = vmatprep.mubr.f32.mxu0 0.0
        %v1711 = vand.u32 %v1096, 4294901760
        %1712 = vmatmul.mubr.f32.gmra.mxu0 %v1711
        %v1713 = vpop.f32.mrf.mxu0
        %v1714 = vadd.f32 %v1586, %v1713
        %v1715 = vpop.f32.mrf.mxu0
        %1716 = vmatprep.mubr.f32.mxu0 0.0
        %v1717 = vand.u32 %v1099, 4294901760
        %1718 = vmatmul.mubr.f32.gmra.mxu0 %v1717
        %v1719 = vpop.f32.mrf.mxu0
        %v1720 = vadd.f32 %v1594, %v1719
        %v1721 = vpop.f32.mrf.mxu0
        %1722 = vmatprep.mubr.f32.mxu0 0.0
        %v1723 = vand.u32 %v1102, 4294901760
        %1724 = vmatmul.mubr.f32.gmra.mxu0 %v1723
        %v1725 = vpop.f32.mrf.mxu0
        %v1726 = vadd.f32 %v1602, %v1725
        %v1727 = vpop.f32.mrf.mxu0
        %1728 = vmatprep.mubr.f32.mxu0 0.0
        %v1729 = vand.u32 %v1105, 4294901760
        %1730 = vmatmul.mubr.f32.gmra.mxu0 %v1729
        %v1731 = vpop.f32.mrf.mxu0
        %v1732 = vadd.f32 %v1610, %v1731
        %v1733 = vpop.f32.mrf.mxu0
        %1734 = vmatprep.mubr.f32.mxu0 0.0
        %v1735 = vand.u32 %v1108, 4294901760
        %1736 = vmatmul.mubr.f32.gmra.mxu0 %v1735
        %v1737 = vpop.f32.mrf.mxu0
        %v1738 = vadd.f32 %v1618, %v1737
        %v1739 = vpop.f32.mrf.mxu0
        %1740 = vmatprep.mubr.f32.mxu0 0.0
        %v1741 = vand.u32 %v1111, 4294901760
        %1742 = vmatmul.mubr.f32.gmra.mxu0 %v1741
        %v1743 = vpop.f32.mrf.mxu0
        %v1744 = vadd.f32 %v1626, %v1743
        %v1745 = vpop.f32.mrf.mxu0
        %1746 = vmatprep.mubr.f32.mxu0 0.0
        %v1747 = vand.u32 %v1114, 4294901760
        %1748 = vmatmul.mubr.f32.gmra.mxu0 %v1747
        %v1749 = vpop.f32.mrf.mxu0
        %v1750 = vadd.f32 %v1634, %v1749
        %v1751 = vpop.f32.mrf.mxu0
        %1752 = vdwg.mxu0
        %1753 = vmatprep.subr.mxu0 0.0
        %1754 = vmatpush1.msra.mxu0 0.0
        %1755 = vmatprep.subr.mxu0 0.0
        %1756 = vmatpush1.msra.mxu0 0.0
        %1757 = vmatprep.subr.mxu0 0.0
        %1758 = vmatpush1.msra.mxu0 0.0
        %1759 = vmatprep.subr.mxu0 0.0
        %1760 = vmatpush1.msra.mxu0 0.0
        %1761 = vmatprep.subr.mxu0 0.0
        %1762 = vmatpush1.msra.mxu0 0.0
        %1763 = vmatprep.subr.mxu0 0.0
        %1764 = vmatpush1.msra.mxu0 0.0
        %1765 = vmatprep.subr.mxu0 0.0
        %1766 = vmatpush1.msra.mxu0 0.0
        %1767 = vmatprep.subr.mxu0 0.0
        %1768 = vmatpush1.msra.mxu0 0.0
        %1769 = vmatprep.subr.mxu0 0.0
        %1770 = vmatpush1.msra.mxu0 0.0
        %1771 = vmatprep.subr.mxu0 0.0
        %1772 = vmatpush1.msra.mxu0 0.0
        %1773 = vmatprep.subr.mxu0 0.0
        %1774 = vmatpush1.msra.mxu0 0.0
        %1775 = vmatprep.subr.mxu0 0.0
        %1776 = vmatpush1.msra.mxu0 0.0
        %1777 = vmatprep.subr.mxu0 0.0
        %1778 = vmatpush1.msra.mxu0 0.0
        %1779 = vmatprep.subr.mxu0 0.0
        %1780 = vmatpush1.msra.mxu0 0.0
        %1781 = vmatprep.subr.mxu0 0.0
        %1782 = vmatpush1.msra.mxu0 0.0
        %1783 = vmatprep.subr.mxu0 0.0
        %v1784 = vand.u32 %v1118, 4294901760
        %1785 = vmatpush1.msra.mxu0 %v1784
        %1786 = vmatprep.subr.mxu0 0.0
        %1787 = vmatpush2.msra.mxu0 0.0
        %1788 = vmatprep.subr.mxu0 0.0
        %1789 = vmatpush2.msra.mxu0 0.0
        %1790 = vmatprep.subr.mxu0 0.0
        %1791 = vmatpush2.msra.mxu0 0.0
        %1792 = vmatprep.subr.mxu0 0.0
        %1793 = vmatpush2.msra.mxu0 0.0
        %1794 = vmatprep.subr.mxu0 0.0
        %1795 = vmatpush2.msra.mxu0 0.0
        %1796 = vmatprep.subr.mxu0 0.0
        %1797 = vmatpush2.msra.mxu0 0.0
        %1798 = vmatprep.subr.mxu0 0.0
        %1799 = vmatpush2.msra.mxu0 0.0
        %1800 = vmatprep.subr.mxu0 0.0
        %1801 = vmatpush2.msra.mxu0 0.0
        %1802 = vmatprep.subr.mxu0 0.0
        %1803 = vmatpush2.msra.mxu0 0.0
        %1804 = vmatprep.subr.mxu0 0.0
        %1805 = vmatpush2.msra.mxu0 0.0
        %1806 = vmatprep.subr.mxu0 0.0
        %1807 = vmatpush2.msra.mxu0 0.0
        %1808 = vmatprep.subr.mxu0 0.0
        %1809 = vmatpush2.msra.mxu0 0.0
        %1810 = vmatprep.subr.mxu0 0.0
        %1811 = vmatpush2.msra.mxu0 0.0
        %1812 = vmatprep.subr.mxu0 0.0
        %1813 = vmatpush2.msra.mxu0 0.0
        %1814 = vmatprep.subr.mxu0 0.0
        %1815 = vmatpush2.msra.mxu0 0.0
        %1816 = vmatprep.subr.mxu0 0.0
        %1817 = vmatpush2.msra.mxu0 0.0
        %1818 = vmatprep.mubr.f32.mxu0 0.0
        %v1819 = vand.u32 %v1093, 4294901760
        %1820 = vmatmul.mubr.f32.gmra.mxu0 %v1819
        %v1821 = vpop.f32.mrf.mxu0
        %v1822 = vadd.f32 %v1708, %v1821
        %v1823 = vpop.f32.mrf.mxu0
        %1824 = vmatprep.mubr.f32.mxu0 0.0
        %v1825 = vand.u32 %v1096, 4294901760
        %1826 = vmatmul.mubr.f32.gmra.mxu0 %v1825
        %v1827 = vpop.f32.mrf.mxu0
        %v1828 = vadd.f32 %v1714, %v1827
        %v1829 = vpop.f32.mrf.mxu0
        %1830 = vmatprep.mubr.f32.mxu0 0.0
        %v1831 = vand.u32 %v1099, 4294901760
        %1832 = vmatmul.mubr.f32.gmra.mxu0 %v1831
        %v1833 = vpop.f32.mrf.mxu0
        %v1834 = vadd.f32 %v1720, %v1833
        %v1835 = vpop.f32.mrf.mxu0
        %1836 = vmatprep.mubr.f32.mxu0 0.0
        %v1837 = vand.u32 %v1102, 4294901760
        %1838 = vmatmul.mubr.f32.gmra.mxu0 %v1837
        %v1839 = vpop.f32.mrf.mxu0
        %v1840 = vadd.f32 %v1726, %v1839
        %v1841 = vpop.f32.mrf.mxu0
        %1842 = vmatprep.mubr.f32.mxu0 0.0
        %v1843 = vand.u32 %v1105, 4294901760
        %1844 = vmatmul.mubr.f32.gmra.mxu0 %v1843
        %v1845 = vpop.f32.mrf.mxu0
        %v1846 = vadd.f32 %v1732, %v1845
        %v1847 = vpop.f32.mrf.mxu0
        %1848 = vmatprep.mubr.f32.mxu0 0.0
        %v1849 = vand.u32 %v1108, 4294901760
        %1850 = vmatmul.mubr.f32.gmra.mxu0 %v1849
        %v1851 = vpop.f32.mrf.mxu0
        %v1852 = vadd.f32 %v1738, %v1851
        %v1853 = vpop.f32.mrf.mxu0
        %1854 = vmatprep.mubr.f32.mxu0 0.0
        %v1855 = vand.u32 %v1111, 4294901760
        %1856 = vmatmul.mubr.f32.gmra.mxu0 %v1855
        %v1857 = vpop.f32.mrf.mxu0
        %v1858 = vadd.f32 %v1744, %v1857
        %v1859 = vpop.f32.mrf.mxu0
        %1860 = vmatprep.mubr.f32.mxu0 0.0
        %v1861 = vand.u32 %v1114, 4294901760
        %1862 = vmatmul.mubr.f32.gmra.mxu0 %v1861
        %v1863 = vpop.f32.mrf.mxu0
        %v1864 = vadd.f32 %v1750, %v1863
        %v1865 = vpop.f32.mrf.mxu0
        %1866 = vdwg.mxu0
        %v1867 = vadd.f32 %v1082, %v1822
        %v1868 = vadd.f32 %v1083, %v1828
        %v1869 = vadd.f32 %v1084, %v1834
        %v1870 = vadd.f32 %v1085, %v1840
        %v1871 = vadd.f32 %v1086, %v1846
        %v1872 = vadd.f32 %v1087, %v1852
        %v1873 = vadd.f32 %v1088, %v1858
        %v1874 = vadd.f32 %v1089, %v1864
        %v1875 = vld [vmem:[%s5] sm:$0x1]
        %v1877 = vlaneseq
        %v1878 = vshrl.u32 %v1877, 7
        %v1879 = vsub.s32 0, %v1878
        %v1880 = vrot.slane %v1875, %v1879
        %v1882 = vadd.f32 %v1867, %v1880
        %v1883 = vadd.f32 %v1868, %v1880
        %v1884 = vadd.f32 %v1869, %v1880
        %v1885 = vadd.f32 %v1870, %v1880
        %v1886 = vadd.f32 %v1871, %v1880
        %v1887 = vadd.f32 %v1872, %v1880
        %v1888 = vadd.f32 %v1873, %v1880
        %v1889 = vadd.f32 %v1874, %v1880
        %v1890 = vmax.f32 %v1882, 0.0
        %v1891 = vmax.f32 %v1883, 0.0
        %v1892 = vmax.f32 %v1884, 0.0
        %v1893 = vmax.f32 %v1885, 0.0
        %v1894 = vmax.f32 %v1886, 0.0
        %v1895 = vmax.f32 %v1887, 0.0
        %v1896 = vmax.f32 %v1888, 0.0
        %v1897 = vmax.f32 %v1889, 0.0
        %v1898 = vcombine.low %v1890, %v1892
        %v1899 = vcombine.high %v1890, %v1892
        %v1901 = vunpack.c.l.s4 1983009808
        %v1902 = vunpack.c.0.s8 %v1901
        %v1903 = vlaneseq
        %v1904 = vshrl.u32 %v1903, 7
        %v1905 = vsub.s32 %v1902, %v1904
        %v1906 = vrot.slane %v1898, %v1905
        %v1908 = vunpack.c.l.s4 1983009808
        %v1909 = vunpack.c.0.s8 %v1908
        %v1910 = vlaneseq
        %v1911 = vshrl.u32 %v1910, 7
        %v1912 = vsub.s32 %v1909, %v1911
        %v1913 = vrot.slane %v1899, %v1912
        %v1914 = vcombine.low %v1891, %v1893
        %v1915 = vcombine.high %v1891, %v1893
        %v1917 = vunpack.c.l.s4 1983009808
        %v1918 = vunpack.c.0.s8 %v1917
        %v1919 = vlaneseq
        %v1920 = vshrl.u32 %v1919, 7
        %v1921 = vsub.s32 %v1918, %v1920
        %v1922 = vrot.slane %v1914, %v1921
        %v1924 = vunpack.c.l.s4 1983009808
        %v1925 = vunpack.c.0.s8 %v1924
        %v1926 = vlaneseq
        %v1927 = vshrl.u32 %v1926, 7
        %v1928 = vsub.s32 %v1925, %v1927
        %v1929 = vrot.slane %v1915, %v1928
        %v1930 = vcombine.low %v1894, %v1896
        %v1931 = vcombine.high %v1894, %v1896
        %v1933 = vunpack.c.l.s4 1983009808
        %v1934 = vunpack.c.0.s8 %v1933
        %v1935 = vlaneseq
        %v1936 = vshrl.u32 %v1935, 7
        %v1937 = vsub.s32 %v1934, %v1936
        %v1938 = vrot.slane %v1930, %v1937
        %v1940 = vunpack.c.l.s4 1983009808
        %v1941 = vunpack.c.0.s8 %v1940
        %v1942 = vlaneseq
        %v1943 = vshrl.u32 %v1942, 7
        %v1944 = vsub.s32 %v1941, %v1943
        %v1945 = vrot.slane %v1931, %v1944
        %v1946 = vcombine.low %v1895, %v1897
        %v1947 = vcombine.high %v1895, %v1897
        %v1949 = vunpack.c.l.s4 1983009808
        %v1950 = vunpack.c.0.s8 %v1949
        %v1951 = vlaneseq
        %v1952 = vshrl.u32 %v1951, 7
        %v1953 = vsub.s32 %v1950, %v1952
        %v1954 = vrot.slane %v1946, %v1953
        %v1956 = vunpack.c.l.s4 1983009808
        %v1957 = vunpack.c.0.s8 %v1956
        %v1958 = vlaneseq
        %v1959 = vshrl.u32 %v1958, 7
        %v1960 = vsub.s32 %v1957, %v1959
        %v1961 = vrot.slane %v1947, %v1960
        %v1962 = vcombine.low %v1906, %v1922
        %v1963 = vcombine.high %v1906, %v1922
        %v1965 = vunpack.c.l.s4 1934713408
        %v1966 = vunpack.c.0.s8 %v1965
        %v1967 = vlaneseq
        %v1968 = vshrl.u32 %v1967, 7
        %v1969 = vsub.s32 %v1966, %v1968
        %v1970 = vrot.slane %v1962, %v1969
        %v1972 = vunpack.c.l.s4 1934713408
        %v1973 = vunpack.c.0.s8 %v1972
        %v1974 = vlaneseq
        %v1975 = vshrl.u32 %v1974, 7
        %v1976 = vsub.s32 %v1973, %v1975
        %v1977 = vrot.slane %v1963, %v1976
        %v1978 = vcombine.low %v1913, %v1929
        %v1979 = vcombine.high %v1913, %v1929
        %v1981 = vunpack.c.l.s4 1934713408
        %v1982 = vunpack.c.0.s8 %v1981
        %v1983 = vlaneseq
        %v1984 = vshrl.u32 %v1983, 7
        %v1985 = vsub.s32 %v1982, %v1984
        %v1986 = vrot.slane %v1978, %v1985
        %v1988 = vunpack.c.l.s4 1934713408
        %v1989 = vunpack.c.0.s8 %v1988
        %v1990 = vlaneseq
        %v1991 = vshrl.u32 %v1990, 7
        %v1992 = vsub.s32 %v1989, %v1991
        %v1993 = vrot.slane %v1979, %v1992
        %v1994 = vcombine.low %v1938, %v1954
        %v1995 = vcombine.high %v1938, %v1954
        %v1997 = vunpack.c.l.s4 1934713408
        %v1998 = vunpack.c.0.s8 %v1997
        %v1999 = vlaneseq
        %v2000 = vshrl.u32 %v1999, 7
        %v2001 = vsub.s32 %v1998, %v2000
        %v2002 = vrot.slane %v1994, %v2001
        %v2004 = vunpack.c.l.s4 1934713408
        %v2005 = vunpack.c.0.s8 %v2004
        %v2006 = vlaneseq
        %v2007 = vshrl.u32 %v2006, 7
        %v2008 = vsub.s32 %v2005, %v2007
        %v2009 = vrot.slane %v1995, %v2008
        %v2010 = vcombine.low %v1945, %v1961
        %v2011 = vcombine.high %v1945, %v1961
        %v2013 = vunpack.c.l.s4 1934713408
        %v2014 = vunpack.c.0.s8 %v2013
        %v2015 = vlaneseq
        %v2016 = vshrl.u32 %v2015, 7
        %v2017 = vsub.s32 %v2014, %v2016
        %v2018 = vrot.slane %v2010, %v2017
        %v2020 = vunpack.c.l.s4 1934713408
        %v2021 = vunpack.c.0.s8 %v2020
        %v2022 = vlaneseq
        %v2023 = vshrl.u32 %v2022, 7
        %v2024 = vsub.s32 %v2021, %v2023
        %v2025 = vrot.slane %v2011, %v2024
        %v2026 = vcombine.low %v1970, %v2002
        %v2027 = vcombine.high %v1970, %v2002
        %v2028 = vcombine.low %v1977, %v2009
        %v2029 = vcombine.high %v1977, %v2009
        %v2030 = vcombine.low %v1986, %v2018
        %v2031 = vcombine.high %v1986, %v2018
        %v2032 = vcombine.low %v1993, %v2025
        %v2033 = vcombine.high %v1993, %v2025
        %2035 = vrot.lane.b32.xlu0 %v2027, 32
        %v2036 = vpop.permute.xlu0 %2035
        %2039 = vrot.lane.b32.xlu0 %v2028, 64
        %v2040 = vpop.permute.xlu0 %2039
        %2043 = vrot.lane.b32.xlu0 %v2029, 96
        %v2044 = vpop.permute.xlu0 %2043
        %2047 = vrot.lane.b32.xlu0 %v2031, 32
        %v2048 = vpop.permute.xlu0 %2047
        %2051 = vrot.lane.b32.xlu0 %v2032, 64
        %v2052 = vpop.permute.xlu0 %2051
        %2055 = vrot.lane.b32.xlu0 %v2033, 96
        %v2056 = vpop.permute.xlu0 %2055
        %vm2058 = vcmask 261120
        %v2059 = vsel %vm2058, %v2026, %v2036
        %vm2060 = vcmask 523264
        %v2061 = vsel %vm2060, %v2059, %v2040
        %vm2062 = vcmask 785408
        %v2063 = vsel %vm2062, %v2061, %v2044
        %v2064 = vsel %vm2058, %v2030, %v2048
        %v2065 = vsel %vm2060, %v2064, %v2052
        %v2066 = vsel %vm2062, %v2065, %v2056
        %2067 = vst [vmem:[%s303] sm:$0xff] %v2063
        %2068 = vst [vmem:[%s303 + $0x8] sm:$0xff] %v2066
        %s2069 = sand.u32 %s187, 1
        %s2070 = scalar_lea.sflag [#allocation3], %s2069
        %s2071 = sand.u32 %s187, 1
        %s2072 = smul.addr %s2071, 16
        %s2073 = scalar_lea.vmem [#allocation2], %s2072
        // Predicated region
        $region45: #{tpu_custom_call.1} parent=43 // pred_check
          %p2074 = pneg %p197
        $region46: #{tpu_custom_call.1} parent=43 // pred_check_branch
          %2076 = sbr.rel (%p2074) target = $region48
        $region47: #{tpu_custom_call.1} parent=43 // pred_region
          %s2078 = ssub.s32 256, 256
          %2079 = vsyncadd %s2070, %s2078
          %s2080 = smul.addr %s25, 2
          %s2081 = smul.addr %s24, 2
          %s2082 = sadd.s32 %s2080, %s2081
          %s2083 = smul.addr %s2082, 128
          %s2084 = scalar_lea.hbm %s6, %s2083
          %s2086 = sshll.u32 %s2073, 4
          %s2087 = int_to_ptr.vmem [resolvable:$true] %s2086
          %2089 = dma.vmem_to_hbm [thread:$0]  %s2087, 256, %s2084, %s2070
        $region48: #{tpu_custom_call.1} parent=43 // pred_fallthru
          _
      $region44: #{tpu_custom_call.1} parent=5 // pred_fallthru
        _
      %p2090 = scmp.le.s32.totalorder 2, %s15
      // Predicated region
      $region49: #{tpu_custom_call.1} parent=5 // pred_check
        %p2091 = pneg %p2090
      $region50: #{tpu_custom_call.1} parent=5 // pred_check_branch
        %2093 = sbr.rel (%p2091) target = $region52
      $region51: #{tpu_custom_call.1} parent=5 // pred_region
        %s2094 = ssub.s32 %s15, 2
        // Predicated region
        $region53: #{tpu_custom_call.1} parent=51 // pred_check
          %p2095 = pneg %p203
        $region54: #{tpu_custom_call.1} parent=51 // pred_check_branch
          %2097 = sbr.rel (%p2095) target = $region56
        $region55: #{tpu_custom_call.1} parent=51 // pred_region
          %s2098 = sand.u32 %s188, 1
          %s2099 = scalar_lea.sflag [#allocation3], %s2098
          %s2100 = sand.u32 %s188, 1
          %s2101 = smul.addr %s2100, 16
          %s2102 = scalar_lea.vmem [#allocation2], %s2101
          %2103 = dma.done %s2099, 256
        $region56: #{tpu_custom_call.1} parent=51 // pred_fallthru
          _
      $region52: #{tpu_custom_call.1} parent=5 // pred_fallthru
        _
    $region6: #{tpu_custom_call.1} parent=1 // loop_footer
      %s19 = sadd.s32 1, %s15
    $region7: #{tpu_custom_call.1} parent=1 // loop_footer_branch
      %14 = sbr.rel target = $region3
    $region8: #{tpu_custom_call.1} parent=1 // loop_exit
      _
    %2104 = vsyncpa [#allocation3], 1
    %s2105 = scalar_lea.sflag [#allocation3], 1
    %2106 = vsyncpa %s2105, 1

</llo_original>
